<compile_context>
chip_gen: v7x
topology: tpu7x:2x2x1
jax: 0.10.0
libtpu: 0.0.40
codegen_flags: <defaults>
</compile_context>

<pallas_src>
import numpy as np
import jax
import jax.numpy as jnp
from jax.experimental import pallas as pl
from jax.experimental.pallas import tpu as pltpu


# ------------------------- packed parameter slab layout ----------------------
LANE = 128                     # lane width; F, HID, C are all padded to this
ROW_W1 = 0                     # rows [0,128)   : W1   padded to [128, 128]
ROW_W2 = LANE                  # rows [128,256) : W2   padded to [128, 128]
ROW_WO = 2 * LANE              # rows [256,384) : Wout padded to [128, 128]
ROW_B = 3 * LANE               # rows [384,400) : bias tile (b1, b2, bo rows)
SLAB_ROWS = 3 * LANE + 16      # 400  (multiple of 16 -> aligned bf16 sublane tiles)


def pack_params(w1, b1, w2, b2, wo, bo):
    """Pack all weights/biases into a single lane-padded bf16 slab [400, 128]."""
    F, HID = w1.shape
    C = wo.shape[1]
    slab = np.zeros((SLAB_ROWS, LANE), np.float32)
    slab[ROW_W1:ROW_W1 + F, 0:HID] = np.asarray(w1)
    slab[ROW_W2:ROW_W2 + HID, 0:HID] = np.asarray(w2)
    slab[ROW_WO:ROW_WO + HID, 0:C] = np.asarray(wo)
    slab[ROW_B + 0, 0:HID] = np.asarray(b1)
    slab[ROW_B + 1, 0:HID] = np.asarray(b2)
    slab[ROW_B + 2, 0:C] = np.asarray(bo)
    return jnp.asarray(slab, jnp.bfloat16)


# ----------------------------- Pallas kernel ---------------------------------
def _gnn_kernel(x_ref, a_ref, pool_ref, p_ref, out_ref):
    f32, bf16 = jnp.float32, jnp.bfloat16

    x = x_ref[...]                    # [Nb, 128] bf16 (features in lanes [0:F))
    a = a_ref[...]                    # [Nb, Nb]  bf16 diagonal block of A_norm
    pool = pool_ref[...]              # [Gb, Nb]  bf16 per-block mean-pool rows

    # Static, 16-row-aligned slices of the packed parameter slab (one operand).
    w1 = p_ref[ROW_W1:ROW_W1 + LANE, :]        # [128, 128] bf16
    w2 = p_ref[ROW_W2:ROW_W2 + LANE, :]
    wo = p_ref[ROW_WO:ROW_WO + LANE, :]
    btile = p_ref[ROW_B:ROW_B + 16, :].astype(f32)
    b1 = btile[0:1, :]                         # [1, 128] f32, broadcast over rows
    b2 = btile[1:2, :]
    bo = btile[2:3, :]

    # GCNConv 1: relu(A_norm @ (X @ W1) + b1)   (bf16 MXU inputs, f32 accum)
    h = jnp.dot(x, w1, preferred_element_type=f32)
    h = jnp.dot(a, h.astype(bf16), preferred_element_type=f32) + b1
    h = jnp.maximum(h, 0.0)

    # GCNConv 2: relu(A_norm @ (H @ W2) + b2)
    h = jnp.dot(h.astype(bf16), w2, preferred_element_type=f32)
    h = jnp.dot(a, h.astype(bf16), preferred_element_type=f32) + b2
    h = jnp.maximum(h, 0.0)

    # global_mean_pool + output Linear; lane-dense [Gb, 128] f32 store.
    g = jnp.dot(pool, h.astype(bf16), preferred_element_type=f32)
    out_ref[...] = jnp.dot(g.astype(bf16), wo, preferred_element_type=f32) + bo


def image_gnn_forward(x_pad, a_norm_bf, pool_bf, param_slab, *,
                      nodes_per_block, graphs_per_block, num_classes):
    """Fused forward over a grid of graph blocks (block-diagonal batching)."""
    N, lane = x_pad.shape
    B = pool_bf.shape[0]
    assert lane == LANE
    assert N % nodes_per_block == 0 and B % graphs_per_block == 0
    num_blocks = N // nodes_per_block
    assert B // graphs_per_block == num_blocks

    out = pl.pallas_call(
        _gnn_kernel,
        out_shape=jax.ShapeDtypeStruct((B, LANE), jnp.float32),
        grid=(num_blocks,),
        in_specs=[
            pl.BlockSpec((nodes_per_block, LANE), lambda i: (i, 0)),              # x block
            pl.BlockSpec((nodes_per_block, nodes_per_block), lambda i: (i, i)),   # A_norm diag block
            pl.BlockSpec((graphs_per_block, nodes_per_block), lambda i: (i, i)),  # pool diag block
            pl.BlockSpec((SLAB_ROWS, LANE), lambda i: (0, 0)),                    # packed params (resident)
        ],
        out_specs=pl.BlockSpec((graphs_per_block, LANE), lambda i: (i, 0)),
        compiler_params=pltpu.CompilerParams(dimension_semantics=("parallel",)),
    )(x_pad, a_norm_bf, pool_bf, param_slab)
    return out[:, :num_classes]


# ------------------------------- JAX glue ------------------------------------
def build_norm_adj(edge_index, num_nodes):
    """D^-1/2 (A + remaining self-loops) D^-1/2, matching PyG gcn_norm."""
    src, dst = edge_index[0], edge_index[1]
    a = jnp.zeros((num_nodes, num_nodes), jnp.float32).at[dst, src].add(1.0)
    diag = jnp.diagonal(a)
    a = a + jnp.diag(jnp.where(diag == 0.0, 1.0, 0.0))   # only add missing self-loops
    deg = a.sum(axis=1)
    d_inv_sqrt = jnp.where(deg > 0, 1.0 / jnp.sqrt(deg), 0.0)
    return d_inv_sqrt[:, None] * a * d_inv_sqrt[None, :]


def build_pool_matrix(batch_index, num_graphs):
    one_hot = (batch_index[None, :] == jnp.arange(num_graphs)[:, None]).astype(jnp.float32)
    counts = one_hot.sum(axis=1, keepdims=True)
    return one_hot / jnp.maximum(counts, 1.0)


def ref_forward_matched(x_pad, a_bf, pool_bf, slab):
    """Reference using the identical bf16 matmul inputs / f32 accumulation."""
    f32, bf16 = jnp.float32, jnp.bfloat16
    w1 = slab[ROW_W1:ROW_W1 + LANE]
    w2 = slab[ROW_W2:ROW_W2 + LANE]
    wo = slab[ROW_WO:ROW_WO + LANE]
    b1 = slab[ROW_B + 0:ROW_B + 1].astype(f32)
    b2 = slab[ROW_B + 1:ROW_B + 2].astype(f32)
    bo = slab[ROW_B + 2:ROW_B + 3].astype(f32)
    h = jnp.dot(x_pad, w1, preferred_element_type=f32)
    h = jnp.dot(a_bf, h.astype(bf16), preferred_element_type=f32) + b1
    h = jnp.maximum(h, 0.0)
    h = jnp.dot(h.astype(bf16), w2, preferred_element_type=f32)
    h = jnp.dot(a_bf, h.astype(bf16), preferred_element_type=f32) + b2
    h = jnp.maximum(h, 0.0)
    g = jnp.dot(pool_bf, h.astype(bf16), preferred_element_type=f32)
    return jnp.dot(g.astype(bf16), wo, preferred_element_type=f32) + bo


def ref_forward_f32(x, a, p, w1, b1, w2, b2, wo, bo):
    """Pure-f32 reference matching the PyTorch module semantics."""
    h = jnp.maximum(a @ (x @ w1) + b1, 0.0)
    h = jnp.maximum(a @ (h @ w2) + b2, 0.0)
    return (p @ h) @ wo + bo


def grid_edges(h, w, offset):
    """Bidirectional 4-neighbour edges of an h x w pixel grid."""
    edges = []
    for r in range(h):
        for c in range(w):
            n = r * w + c + offset
            if c + 1 < w:
                edges += [(n, n + 1), (n + 1, n)]
            if r + 1 < h:
                edges += [(n, n + w), (n + w, n)]
    return edges


# --------------------------------- main ---------------------------------------
if __name__ == "__main__":
    # Image graphs: 32 graphs, each a 4x4 pixel grid -> 512 nodes total.
    # Batched into 2 blocks of 16 graphs (256 nodes) per grid step.
    H_img, W_img = 4, 4
    nodes_per_graph = H_img * W_img                        # 16
    graphs_per_block = 16
    num_blocks = 2
    num_graphs = graphs_per_block * num_blocks             # 32
    nodes_per_block = graphs_per_block * nodes_per_graph   # 256
    N = num_graphs * nodes_per_graph                       # 512
    F = 8                                                  # feature_size
    HID = 32                                               # hidden_size
    C = 4                                                  # num_classes

    edges = []
    for g in range(num_graphs):
        edges += grid_edges(H_img, W_img, g * nodes_per_graph)
    edge_index = jnp.asarray(np.array(edges, dtype=np.int32).T)          # [2, E]
    batch_index = jnp.repeat(jnp.arange(num_graphs, dtype=jnp.int32),
                             nodes_per_graph)                            # [N]

    key = jax.random.PRNGKey(0)
    kx, kw1, kb1, kw2, kb2, kwo, kbo = jax.random.split(key, 7)
    x = jax.random.normal(kx, (N, F), jnp.float32)
    w1 = jax.random.normal(kw1, (F, HID), jnp.float32) * 0.1
    b1 = jax.random.normal(kb1, (HID,), jnp.float32) * 0.1
    w2 = jax.random.normal(kw2, (HID, HID), jnp.float32) * 0.1
    b2 = jax.random.normal(kb2, (HID,), jnp.float32) * 0.1
    wo = jax.random.normal(kwo, (HID, C), jnp.float32) * 0.1  # Linear stored [in, out]
    bo = jax.random.normal(kbo, (C,), jnp.float32) * 0.1

    # Preprocessing (data-dependent scatter / segment ops) in plain JAX.
    a_norm = build_norm_adj(edge_index, N)
    pool_mat = build_pool_matrix(batch_index, num_graphs)

    # Kernel operands: packed param slab + lane-padded bf16 activations/adjacency.
    slab = pack_params(w1, b1, w2, b2, wo, bo)
    x_pad = jnp.zeros((N, LANE), jnp.bfloat16).at[:, :F].set(x.astype(jnp.bfloat16))
    a_bf = a_norm.astype(jnp.bfloat16)
    pool_bf = pool_mat.astype(jnp.bfloat16)

    out = image_gnn_forward(x_pad, a_bf, pool_bf, slab,
                            nodes_per_block=nodes_per_block,
                            graphs_per_block=graphs_per_block,
                            num_classes=C)
    out = jax.block_until_ready(out)
    assert out.shape == (num_graphs, C)

    # Tight check vs a reference with the identical bf16/f32 mixed precision.
    ref_m = ref_forward_matched(x_pad, a_bf, pool_bf, slab)[:, :C]
    np.testing.assert_allclose(np.asarray(out), np.asarray(ref_m), atol=2e-3, rtol=2e-3)

    # Loose check vs the pure-f32 module semantics (bf16 rounding tolerance).
    ref_f = ref_forward_f32(x, a_norm, pool_mat, w1, b1, w2, b2, wo, bo)
    np.testing.assert_allclose(np.asarray(out), np.asarray(ref_f), atol=5e-2, rtol=5e-2)

    print("KERNEL_OK")
</pallas_src>

<mosaic_0001>
module attributes {stable_mosaic.version = 11 : i64} {
  func.func @_gnn_kernel(%arg0: i32, %arg1: memref<256x128xbf16, #tpu.memory_space<vmem>>, %arg2: memref<256x256xbf16, #tpu.memory_space<vmem>>, %arg3: memref<16x256xbf16, #tpu.memory_space<vmem>>, %arg4: memref<400x128xbf16, #tpu.memory_space<vmem>>, %arg5: memref<16x128xf32, #tpu.memory_space<vmem>>) attributes {dimension_semantics = [#tpu.dimension_semantics<parallel>], iteration_bounds = array<i64: 2>, scalar_prefetch = 0 : i64, scratch_operands = 0 : i64, tpu.core_type = #tpu.core_type<tc>, window_params = [{transform_indices = @transform_0, window_bounds = array<i64: 256, 128>}, {transform_indices = @transform_1, window_bounds = array<i64: 256, 256>}, {transform_indices = @transform_2, window_bounds = array<i64: 16, 256>}, {pipeline_mode = #tpu.pipeline_mode<synchronous>, transform_indices = @transform_3, window_bounds = array<i64: 400, 128>}, {transform_indices = @transform_4, window_bounds = array<i64: 16, 128>}]} {
    %c0 = arith.constant 0 : index
    %c0_0 = arith.constant 0 : index
    %0 = vector.load %arg1[%c0, %c0_0] : memref<256x128xbf16, #tpu.memory_space<vmem>>, vector<256x128xbf16>
    %c0_1 = arith.constant 0 : index
    %c0_2 = arith.constant 0 : index
    %1 = vector.load %arg2[%c0_1, %c0_2] : memref<256x256xbf16, #tpu.memory_space<vmem>>, vector<256x256xbf16>
    %c0_3 = arith.constant 0 : index
    %c0_4 = arith.constant 0 : index
    %2 = vector.load %arg3[%c0_3, %c0_4] : memref<16x256xbf16, #tpu.memory_space<vmem>>, vector<16x256xbf16>
    %c0_5 = arith.constant 0 : index
    %c0_6 = arith.constant 0 : index
    %3 = vector.load %arg4[%c0_5, %c0_6] : memref<400x128xbf16, #tpu.memory_space<vmem>>, vector<128x128xbf16>
    %c128 = arith.constant 128 : index
    %c0_7 = arith.constant 0 : index
    %4 = vector.load %arg4[%c128, %c0_7] : memref<400x128xbf16, #tpu.memory_space<vmem>>, vector<128x128xbf16>
    %c256 = arith.constant 256 : index
    %c0_8 = arith.constant 0 : index
    %5 = vector.load %arg4[%c256, %c0_8] : memref<400x128xbf16, #tpu.memory_space<vmem>>, vector<128x128xbf16>
    %c384 = arith.constant 384 : index
    %c0_9 = arith.constant 0 : index
    %6 = vector.load %arg4[%c384, %c0_9] : memref<400x128xbf16, #tpu.memory_space<vmem>>, vector<16x128xbf16>
    %7 = arith.extf %6 : vector<16x128xbf16> to vector<16x128xf32>
    %8 = vector.extract_strided_slice %7 {offsets = [0, 0], sizes = [1, 128], strides = [1, 1]} : vector<16x128xf32> to vector<1x128xf32>
    %9 = vector.extract_strided_slice %7 {offsets = [1, 0], sizes = [1, 128], strides = [1, 1]} : vector<16x128xf32> to vector<1x128xf32>
    %10 = vector.extract_strided_slice %7 {offsets = [2, 0], sizes = [1, 128], strides = [1, 1]} : vector<16x128xf32> to vector<1x128xf32>
    %cst = arith.constant dense<0.000000e+00> : vector<256x128xf32>
    %11 = tpu.matmul %0, %3, %cst {dimension_numbers = #tpu.dot_dimension_numbers<[1], [0], [0], [1], [0, 0, 1, 1], [], []>} : vector<256x128xbf16>, vector<128x128xbf16>, vector<256x128xf32> -> vector<256x128xf32>
    %12 = arith.truncf %11 : vector<256x128xf32> to vector<256x128xbf16>
    %cst_10 = arith.constant dense<0.000000e+00> : vector<256x128xf32>
    %13 = tpu.matmul %1, %12, %cst_10 {dimension_numbers = #tpu.dot_dimension_numbers<[1], [0], [0], [1], [0, 0, 1, 1], [], []>} : vector<256x256xbf16>, vector<256x128xbf16>, vector<256x128xf32> -> vector<256x128xf32>
    %14 = vector.broadcast %8 : vector<1x128xf32> to vector<256x128xf32>
    %15 = arith.addf %13, %14 : vector<256x128xf32>
    %cst_11 = arith.constant 0.000000e+00 : f32
    %16 = vector.broadcast %cst_11 : f32 to vector<256x128xf32>
    %17 = arith.maximumf %15, %16 : vector<256x128xf32>
    %18 = arith.truncf %17 : vector<256x128xf32> to vector<256x128xbf16>
    %cst_12 = arith.constant dense<0.000000e+00> : vector<256x128xf32>
    %19 = tpu.matmul %18, %4, %cst_12 {dimension_numbers = #tpu.dot_dimension_numbers<[1], [0], [0], [1], [0, 0, 1, 1], [], []>} : vector<256x128xbf16>, vector<128x128xbf16>, vector<256x128xf32> -> vector<256x128xf32>
    %20 = arith.truncf %19 : vector<256x128xf32> to vector<256x128xbf16>
    %cst_13 = arith.constant dense<0.000000e+00> : vector<256x128xf32>
    %21 = tpu.matmul %1, %20, %cst_13 {dimension_numbers = #tpu.dot_dimension_numbers<[1], [0], [0], [1], [0, 0, 1, 1], [], []>} : vector<256x256xbf16>, vector<256x128xbf16>, vector<256x128xf32> -> vector<256x128xf32>
    %22 = vector.broadcast %9 : vector<1x128xf32> to vector<256x128xf32>
    %23 = arith.addf %21, %22 : vector<256x128xf32>
    %cst_14 = arith.constant 0.000000e+00 : f32
    %24 = vector.broadcast %cst_14 : f32 to vector<256x128xf32>
    %25 = arith.maximumf %23, %24 : vector<256x128xf32>
    %26 = arith.truncf %25 : vector<256x128xf32> to vector<256x128xbf16>
    %cst_15 = arith.constant dense<0.000000e+00> : vector<16x128xf32>
    %27 = tpu.matmul %2, %26, %cst_15 {dimension_numbers = #tpu.dot_dimension_numbers<[1], [0], [0], [1], [0, 0, 1, 1], [], []>} : vector<16x256xbf16>, vector<256x128xbf16>, vector<16x128xf32> -> vector<16x128xf32>
    %28 = arith.truncf %27 : vector<16x128xf32> to vector<16x128xbf16>
    %cst_16 = arith.constant dense<0.000000e+00> : vector<16x128xf32>
    %29 = tpu.matmul %28, %5, %cst_16 {dimension_numbers = #tpu.dot_dimension_numbers<[1], [0], [0], [1], [0, 0, 1, 1], [], []>} : vector<16x128xbf16>, vector<128x128xbf16>, vector<16x128xf32> -> vector<16x128xf32>
    %30 = vector.broadcast %10 : vector<1x128xf32> to vector<16x128xf32>
    %31 = arith.addf %29, %30 : vector<16x128xf32>
    %c0_17 = arith.constant 0 : index
    %c0_18 = arith.constant 0 : index
    %32 = vector.load %arg5[%c0_17, %c0_18] : memref<16x128xf32, #tpu.memory_space<vmem>>, vector<16x128xf32>
    tpu.vector_store %arg5[%c0_17, %c0_18], %31 {strides = array<i32>} : memref<16x128xf32, #tpu.memory_space<vmem>>, vector<16x128xf32>,
    return
  }
  func.func @transform_0(%arg0: i32) -> (i32, i32) {
    %c0_i32 = arith.constant 0 : i32
    %c0_i32_0 = arith.constant 0 : i32
    return %arg0, %c0_i32 : i32, i32
  }
  func.func @transform_1(%arg0: i32) -> (i32, i32) {
    %c0_i32 = arith.constant 0 : i32
    return %arg0, %arg0 : i32, i32
  }
  func.func @transform_2(%arg0: i32) -> (i32, i32) {
    %c0_i32 = arith.constant 0 : i32
    return %arg0, %arg0 : i32, i32
  }
  func.func @transform_3(%arg0: i32) -> (i32, i32) {
    %c0_i32 = arith.constant 0 : i32
    %c0_i32_0 = arith.constant 0 : i32
    %c0_i32_1 = arith.constant 0 : i32
    return %c0_i32, %c0_i32_0 : i32, i32
  }
  func.func @transform_4(%arg0: i32) -> (i32, i32) {
    %c0_i32 = arith.constant 0 : i32
    %c0_i32_0 = arith.constant 0 : i32
    return %arg0, %c0_i32 : i32, i32
  }
}

</mosaic_0001>

<llo_original>
// kernel: tpu_custom_call.1
$region0: #{tpu_custom_call.1}
  #allocation0 [shape = 'u32[]', space=smem, size = 0x4, offset = 0x4, fixed_abs, tag = 'smem constant byte address 0x4 - core index']
  #allocation1 [shape = 'u32[144,128]{1,0:T(1,128)}', space=vmem, size = 0x12000, scoped, tag = 'internal scratch']
  %s0 = inlined_call_operand.hbm [shape: bf16[512,128], index: 0, kind: input, shape index: {}]
  %s1 = inlined_call_operand.hbm [shape: bf16[512,512], index: 1, kind: input, shape index: {}]
  %s2 = inlined_call_operand.hbm [shape: bf16[32,512], index: 2, kind: input, shape index: {}]
  %s3 = inlined_call_operand.hbm [shape: bf16[400,128], index: 3, kind: input, shape index: {}]
  %s4 = inlined_call_operand.hbm [shape: f32[32,128], index: 4, kind: output, shape index: {}]
  %s5 = sld [smem:[#allocation0]]
  $region65: #{tpu_custom_call.1} parent=0
    _
  %s7 = ssub.s32 1, %s5
  %s8 = scalar_select 0, %s7, %s5
  $region1: #{tpu_custom_call.1} parent=0
    #allocation2 [shape = 'u8[131072]{0}', space=vmem, size = 0x20000, scoped, tag = 'input window, operand 0']
    #allocation3 [shape = 's32[2]{0}', space=sflag, size = 0x8, scoped, tag = 'scoped memory for tpu_custom_call.1']
    #allocation4 [shape = 's32[2]{0}', space=sflag, size = 0x8, scoped, tag = 'scoped memory for tpu_custom_call.1']
    #allocation5 [shape = 'u8[262144]{0}', space=vmem, size = 0x40000, scoped, tag = 'input window, operand 1']
    #allocation6 [shape = 's32[2]{0}', space=sflag, size = 0x8, scoped, tag = 'scoped memory for tpu_custom_call.1']
    #allocation7 [shape = 'u8[16384]{0}', space=vmem, size = 0x4000, scoped, tag = 'input window, operand 2']
    #allocation8 [shape = 'u8[102400]{0}', space=vmem, size = 0x19000, scoped, tag = 'input window, operand 3, single buffered']
    #allocation9 [shape = 's32[1]{0}', space=sflag, size = 0x4, scoped, tag = 'scoped memory for tpu_custom_call.1']
    #allocation10 [shape = 'u8[16384]{0}', space=vmem, size = 0x4000, scoped, tag = 'output window, operand 0']
    %9 = vsyncpa [#allocation3], 0
    %s10 = scalar_lea.sflag [#allocation3], 1
    %11 = vsyncpa %s10, 0
    %12 = vsyncpa [#allocation6], 0
    %s13 = scalar_lea.sflag [#allocation6], 1
    %14 = vsyncpa %s13, 0
    %15 = vsyncpa [#allocation9], 0
    %16 = vsyncpa [#allocation4], 0
    %s17 = scalar_lea.sflag [#allocation4], 1
    %18 = vsyncpa %s17, 0
    loop: start=0, step=1, limit=4
    $region2: #{tpu_custom_call.1} parent=1 // loop_pre_header
      _
    $region3: #{tpu_custom_call.1} parent=1 // loop_header
      %s20 = sphi 0, %s24
      %p21 = scmp.ge.s32.totalorder %s20, 4
      %s30 = sphi 0, %s32
      %s33 = sphi 0, %s30
      %s34 = sphi 0, %s33
      %s50 = sphi 0, %s34
      %s58 = sphi 0, %s60
      %s61 = sphi 0, %s58
      %s62 = sphi 0, %s61
      %s78 = sphi 0, %s62
      %s86 = sphi 0, %s88
      %s89 = sphi 0, %s86
      %s90 = sphi 0, %s89
      %s106 = sphi 0, %s90
      %s110 = sphi 0, %s110
      %s112 = sphi 0, %s110
      %s113 = sphi 0, %s112
      %s127 = sphi 0, %s113
      %s133 = sphi 0, %s135
      %s136 = sphi 0, %s133
      %s137 = sphi 0, %s136
      %s153 = sphi 0, %s137
    $region4: #{tpu_custom_call.1} parent=1 // loop_header_branch
      %23 = sbr.rel (%p21) target = $region8
    $region5: #{tpu_custom_call.1} parent=1 // loop_body
      %s25 = ssub.s32 %s20, 1
      %s26 = ssub.s32 %s20, 2
      %s27 = sadd.s32 %s20, 1
      %s28 = ssub.s32 %s20, %s27
      %p29 = scmp.eq.s32.totalorder %s28, 0
      %s31 = sadd.s32 %s30, 1
      %s32 = scalar_select %p29, %s30, %s31
      %p35 = pneg %p29
      %p36 = scmp.eq.s32.totalorder %s20, 1
      %p37 = por %p35, %p36
      %p38 = scmp.ne.s32.totalorder %s30, %s33
      %p39 = scmp.eq.s32.totalorder %s20, 0
      %p40 = por %p38, %p39
      %p41 = scmp.ne.s32.totalorder %s30, %s33
      %p42 = scmp.eq.s32.totalorder %s25, 1
      %p43 = por %p41, %p42
      %p44 = scmp.ne.s32.totalorder %s33, %s34
      %p45 = scmp.eq.s32.totalorder %s25, 0
      %p46 = por %p44, %p45
      %p47 = scmp.ne.s32.totalorder %s33, %s34
      %p48 = scmp.eq.s32.totalorder %s26, 1
      %p49 = por %p47, %p48
      %p51 = scmp.ne.s32.totalorder %s34, %s50
      %p52 = scmp.eq.s32.totalorder %s26, 0
      %p53 = por %p51, %p52
      %s54 = ssub.s32 %s20, %s27
      %s55 = ssub.s32 %s20, %s27
      %s56 = sor.u32 %s54, %s55
      %p57 = scmp.eq.s32.totalorder %s56, 0
      %s59 = sadd.s32 %s58, 1
      %s60 = scalar_select %p57, %s58, %s59
      %p63 = pneg %p57
      %p64 = scmp.eq.s32.totalorder %s20, 1
      %p65 = por %p63, %p64
      %p66 = scmp.ne.s32.totalorder %s58, %s61
      %p67 = scmp.eq.s32.totalorder %s20, 0
      %p68 = por %p66, %p67
      %p69 = scmp.ne.s32.totalorder %s58, %s61
      %p70 = scmp.eq.s32.totalorder %s25, 1
      %p71 = por %p69, %p70
      %p72 = scmp.ne.s32.totalorder %s61, %s62
      %p73 = scmp.eq.s32.totalorder %s25, 0
      %p74 = por %p72, %p73
      %p75 = scmp.ne.s32.totalorder %s61, %s62
      %p76 = scmp.eq.s32.totalorder %s26, 1
      %p77 = por %p75, %p76
      %p79 = scmp.ne.s32.totalorder %s62, %s78
      %p80 = scmp.eq.s32.totalorder %s26, 0
      %p81 = por %p79, %p80
      %s82 = ssub.s32 %s20, %s27
      %s83 = ssub.s32 %s20, %s27
      %s84 = sor.u32 %s82, %s83
      %p85 = scmp.eq.s32.totalorder %s84, 0
      %s87 = sadd.s32 %s86, 1
      %s88 = scalar_select %p85, %s86, %s87
      %p91 = pneg %p85
      %p92 = scmp.eq.s32.totalorder %s20, 1
      %p93 = por %p91, %p92
      %p94 = scmp.ne.s32.totalorder %s86, %s89
      %p95 = scmp.eq.s32.totalorder %s20, 0
      %p96 = por %p94, %p95
      %p97 = scmp.ne.s32.totalorder %s86, %s89
      %p98 = scmp.eq.s32.totalorder %s25, 1
      %p99 = por %p97, %p98
      %p100 = scmp.ne.s32.totalorder %s89, %s90
      %p101 = scmp.eq.s32.totalorder %s25, 0
      %p102 = por %p100, %p101
      %p103 = scmp.ne.s32.totalorder %s89, %s90
      %p104 = scmp.eq.s32.totalorder %s26, 1
      %p105 = por %p103, %p104
      %p107 = scmp.ne.s32.totalorder %s90, %s106
      %p108 = scmp.eq.s32.totalorder %s26, 0
      %p109 = por %p107, %p108
      %s111 = sadd.s32 %s110, 1
      %p114 = scmp.eq.s32.totalorder %s20, 1
      %p115 = scmp.ne.s32.totalorder %s110, %s112
      %p116 = scmp.eq.s32.totalorder %s20, 0
      %p117 = por %p115, %p116
      %p118 = scmp.ne.s32.totalorder %s110, %s112
      %p119 = scmp.eq.s32.totalorder %s25, 1
      %p120 = por %p118, %p119
      %p121 = scmp.ne.s32.totalorder %s112, %s113
      %p122 = scmp.eq.s32.totalorder %s25, 0
      %p123 = por %p121, %p122
      %p124 = scmp.ne.s32.totalorder %s112, %s113
      %p125 = scmp.eq.s32.totalorder %s26, 1
      %p126 = por %p124, %p125
      %p128 = scmp.ne.s32.totalorder %s113, %s127
      %p129 = scmp.eq.s32.totalorder %s26, 0
      %p130 = por %p128, %p129
      %s131 = ssub.s32 %s20, %s27
      %p132 = scmp.eq.s32.totalorder %s131, 0
      %s134 = sadd.s32 %s133, 1
      %s135 = scalar_select %p132, %s133, %s134
      %p138 = pneg %p132
      %p139 = scmp.eq.s32.totalorder %s20, 1
      %p140 = por %p138, %p139
      %p141 = scmp.ne.s32.totalorder %s133, %s136
      %p142 = scmp.eq.s32.totalorder %s20, 0
      %p143 = por %p141, %p142
      %p144 = scmp.ne.s32.totalorder %s133, %s136
      %p145 = scmp.eq.s32.totalorder %s25, 1
      %p146 = por %p144, %p145
      %p147 = scmp.ne.s32.totalorder %s136, %s137
      %p148 = scmp.eq.s32.totalorder %s25, 0
      %p149 = por %p147, %p148
      %p150 = scmp.ne.s32.totalorder %s136, %s137
      %p151 = scmp.eq.s32.totalorder %s26, 1
      %p152 = por %p150, %p151
      %p154 = scmp.ne.s32.totalorder %s137, %s153
      %p155 = scmp.eq.s32.totalorder %s26, 0
      %p156 = por %p154, %p155
      %p157 = scmp.le.s32.totalorder 1, %s20
      %p158 = scmp.lt.s32.totalorder %s20, 3
      %p159 = pnand %p157, %p158
      %p160 = pneg %p159
      // Predicated region
      $region9: #{tpu_custom_call.1} parent=5 // pred_check
        _
      $region10: #{tpu_custom_call.1} parent=5 // pred_check_branch
        %162 = sbr.rel (%p159) target = $region12
      $region11: #{tpu_custom_call.1} parent=5 // pred_region
        %s163 = ssub.s32 %s20, 1
        // Predicated region
        $region13: #{tpu_custom_call.1} parent=11 // pred_check
          %p164 = pneg %p123
        $region14: #{tpu_custom_call.1} parent=11 // pred_check_branch
          %166 = sbr.rel (%p164) target = $region16
        $region15: #{tpu_custom_call.1} parent=11 // pred_region
          %s168 = ssub.s32 3200, 3200
          %169 = vsyncadd [#allocation9], %s168
          %s170 = sshll.u32 [#allocation8], 4
          %s171 = int_to_ptr.vmem [resolvable:$true] %s170
          %176 = dma.hbm_to_vmem [thread:$0]  %s3, 3200, %s171, [#allocation9], 64, 64, 4
        $region16: #{tpu_custom_call.1} parent=11 // pred_fallthru
          _
      $region12: #{tpu_custom_call.1} parent=5 // pred_fallthru
        _
      %p177 = scmp.lt.s32.totalorder %s20, 2
      // Predicated region
      $region17: #{tpu_custom_call.1} parent=5 // pred_check
        %p178 = pneg %p177
      $region18: #{tpu_custom_call.1} parent=5 // pred_check_branch
        %180 = sbr.rel (%p178) target = $region20
      $region19: #{tpu_custom_call.1} parent=5 // pred_region
        // Predicated region
        $region21: #{tpu_custom_call.1} parent=19 // pred_check
          %p181 = pneg %p40
        $region22: #{tpu_custom_call.1} parent=19 // pred_check_branch
          %183 = sbr.rel (%p181) target = $region24
        $region23: #{tpu_custom_call.1} parent=19 // pred_region
          %s184 = sand.u32 %s30, 1
          %s185 = scalar_lea.sflag [#allocation3], %s184
          %s186 = sand.u32 %s30, 1
          %s187 = smul.addr %s186, 128
          %s188 = scalar_lea.vmem [#allocation2], %s187
          %s189 = smul.u32 32, %s20
          %s191 = ssub.s32 2048, 2048
          %192 = vsyncadd %s185, %s191
          %s193 = smul.addr %s189, 64
          %s194 = scalar_lea.hbm %s0, %s193
          %s195 = sshll.u32 %s188, 4
          %s196 = int_to_ptr.vmem [resolvable:$true] %s195
          %201 = dma.hbm_to_vmem [thread:$0]  %s194, 2048, %s196, %s185, 64, 64, 4
        $region24: #{tpu_custom_call.1} parent=19 // pred_fallthru
          _
        // Predicated region
        $region25: #{tpu_custom_call.1} parent=19 // pred_check
          %p202 = pneg %p68
        $region26: #{tpu_custom_call.1} parent=19 // pred_check_branch
          %204 = sbr.rel (%p202) target = $region28
        $region27: #{tpu_custom_call.1} parent=19 // pred_region
          %s205 = sand.u32 %s20, 1
          %s206 = scalar_lea.sflag [#allocation6], %s205
          %s207 = sand.u32 %s58, 1
          %s208 = smul.addr %s207, 256
          %s209 = scalar_lea.vmem [#allocation5], %s208
          %s210 = smul.u32 32, %s20
          %s211 = smul.u32 2, %s20
          %s213 = ssub.s32 4096, 4096
          %214 = vsyncadd %s206, %s213
          %s215 = smul.addr %s210, 4
          %s216 = sadd.s32 %s211, %s215
          %s217 = smul.addr %s216, 64
          %s218 = scalar_lea.hbm %s1, %s217
          %s219 = sshll.u32 %s209, 4
          %s220 = int_to_ptr.vmem [resolvable:$true] %s219
          %225 = dma.hbm_to_vmem [thread:$0]  %s218, 4096, %s220, %s206, 256, 128, 8
        $region28: #{tpu_custom_call.1} parent=19 // pred_fallthru
          _
        // Predicated region
        $region29: #{tpu_custom_call.1} parent=19 // pred_check
          %p226 = pneg %p96
        $region30: #{tpu_custom_call.1} parent=19 // pred_check_branch
          %228 = sbr.rel (%p226) target = $region32
        $region31: #{tpu_custom_call.1} parent=19 // pred_region
          %s229 = sand.u32 %s20, 1
          %s230 = scalar_lea.sflag [#allocation6], %s229
          %s231 = sand.u32 %s86, 1
          %s232 = smul.addr %s231, 16
          %s233 = scalar_lea.vmem [#allocation7], %s232
          %s234 = smul.u32 2, %s20
          %s235 = smul.u32 2, %s20
          %s237 = ssub.s32 256, 256
          %238 = vsyncadd %s230, %s237
          %s239 = smul.addr %s234, 4
          %s240 = sadd.s32 %s235, %s239
          %s241 = smul.addr %s240, 64
          %s242 = scalar_lea.hbm %s2, %s241
          %s243 = sshll.u32 %s233, 4
          %s244 = int_to_ptr.vmem [resolvable:$true] %s243
          %249 = dma.hbm_to_vmem [thread:$0]  %s242, 256, %s244, %s230, 256, 128, 8
        $region32: #{tpu_custom_call.1} parent=19 // pred_fallthru
          _
      $region20: #{tpu_custom_call.1} parent=5 // pred_fallthru
        _
      %p250 = scmp.le.s32.totalorder 1, %s20
      %p251 = scmp.lt.s32.totalorder %s20, 3
      %p252 = pnand %p250, %p251
      %p253 = pneg %p252
      // Predicated region
      $region33: #{tpu_custom_call.1} parent=5 // pred_check
        _
      $region34: #{tpu_custom_call.1} parent=5 // pred_check_branch
        %255 = sbr.rel (%p252) target = $region36
      $region35: #{tpu_custom_call.1} parent=5 // pred_region
        %s256 = ssub.s32 %s20, 1
        %s257 = sand.u32 %s33, 1
        %s258 = scalar_lea.sflag [#allocation3], %s257
        %s259 = sand.u32 %s33, 1
        %s260 = smul.addr %s259, 128
        %s261 = scalar_lea.vmem [#allocation2], %s260
        // Predicated region
        $region37: #{tpu_custom_call.1} parent=35 // pred_check
          %p262 = pneg %p46
        $region38: #{tpu_custom_call.1} parent=35 // pred_check_branch
          %264 = sbr.rel (%p262) target = $region40
        $region39: #{tpu_custom_call.1} parent=35 // pred_region
          %265 = dma.done %s258, 2048
        $region40: #{tpu_custom_call.1} parent=35 // pred_fallthru
          _
        %s266 = sand.u32 %s25, 1
        %s267 = scalar_lea.sflag [#allocation6], %s266
        %s268 = sand.u32 %s61, 1
        %s269 = smul.addr %s268, 256
        %s270 = scalar_lea.vmem [#allocation5], %s269
        // Predicated region
        $region41: #{tpu_custom_call.1} parent=35 // pred_check
          %p271 = pneg %p74
        $region42: #{tpu_custom_call.1} parent=35 // pred_check_branch
          %273 = sbr.rel (%p271) target = $region44
        $region43: #{tpu_custom_call.1} parent=35 // pred_region
          %274 = dma.done %s267, 4096
        $region44: #{tpu_custom_call.1} parent=35 // pred_fallthru
          _
        %s275 = sand.u32 %s25, 1
        %s276 = scalar_lea.sflag [#allocation6], %s275
        %s277 = sand.u32 %s89, 1
        %s278 = smul.addr %s277, 16
        %s279 = scalar_lea.vmem [#allocation7], %s278
        // Predicated region
        $region45: #{tpu_custom_call.1} parent=35 // pred_check
          %p280 = pneg %p102
        $region46: #{tpu_custom_call.1} parent=35 // pred_check_branch
          %282 = sbr.rel (%p280) target = $region48
        $region47: #{tpu_custom_call.1} parent=35 // pred_region
          %283 = dma.done %s276, 256
        $region48: #{tpu_custom_call.1} parent=35 // pred_fallthru
          _
        // Predicated region
        $region49: #{tpu_custom_call.1} parent=35 // pred_check
          %p284 = pneg %p123
        $region50: #{tpu_custom_call.1} parent=35 // pred_check_branch
          %286 = sbr.rel (%p284) target = $region52
        $region51: #{tpu_custom_call.1} parent=35 // pred_region
          %287 = dma.done [#allocation9], 3200
        $region52: #{tpu_custom_call.1} parent=35 // pred_fallthru
          _
        %s288 = sand.u32 %s33, 1
        %s289 = scalar_lea.sflag [#allocation3], %s288
        %s290 = sand.u32 %s33, 1
        %s291 = smul.addr %s290, 128
        %s292 = scalar_lea.vmem [#allocation2], %s291
        %p293 = pneg %p46
        %p294 = pneg %p43
        %s295 = sand.u32 %s25, 1
        %s296 = scalar_lea.sflag [#allocation6], %s295
        %s297 = sand.u32 %s61, 1
        %s298 = smul.addr %s297, 256
        %s299 = scalar_lea.vmem [#allocation5], %s298
        %p300 = pneg %p74
        %p301 = pneg %p71
        %s302 = sand.u32 %s25, 1
        %s303 = scalar_lea.sflag [#allocation6], %s302
        %s304 = sand.u32 %s89, 1
        %s305 = smul.addr %s304, 16
        %s306 = scalar_lea.vmem [#allocation7], %s305
        %p307 = pneg %p102
        %p308 = pneg %p99
        %p309 = pneg %p123
        %p310 = pneg %p120
        %p311 = pneg %p149
        %p312 = pneg %p146
        %s313 = sand.u32 %s136, 1
        %s314 = scalar_lea.sflag [#allocation4], %s313
        %s315 = sand.u32 %s136, 1
        %s316 = smul.addr %s315, 16
        %s317 = scalar_lea.vmem [#allocation10], %s316
        %s318 = smul.u32 32, %s25
        %s319 = smul.u32 32, %s25
        %s320 = smul.u32 2, %s25
        %s321 = smul.u32 2, %s25
        %s322 = smul.u32 2, %s25
        %s323 = smul.u32 2, %s25
        %v325 = vld [vmem:[%s261] sm:$0xf]
        %v326 = vld [vmem:[%s261 + $0x4] sm:$0xf]
        %v327 = vld [vmem:[%s261 + $0x8] sm:$0xf]
        %v328 = vld [vmem:[%s261 + $0xc] sm:$0xf]
        %v329 = vld [vmem:[%s261 + $0x10] sm:$0xf]
        %v330 = vld [vmem:[%s261 + $0x14] sm:$0xf]
        %v331 = vld [vmem:[%s261 + $0x18] sm:$0xf]
        %v332 = vld [vmem:[%s261 + $0x1c] sm:$0xf]
        %v333 = vld [vmem:[%s261 + $0x20] sm:$0xf]
        %v334 = vld [vmem:[%s261 + $0x24] sm:$0xf]
        %v335 = vld [vmem:[%s261 + $0x28] sm:$0xf]
        %v336 = vld [vmem:[%s261 + $0x2c] sm:$0xf]
        %v337 = vld [vmem:[%s261 + $0x30] sm:$0xf]
        %v338 = vld [vmem:[%s261 + $0x34] sm:$0xf]
        %v339 = vld [vmem:[%s261 + $0x38] sm:$0xf]
        %v340 = vld [vmem:[%s261 + $0x3c] sm:$0xf]
        %v341 = vld [vmem:[%s261 + $0x40] sm:$0xf]
        %v342 = vld [vmem:[%s261 + $0x44] sm:$0xf]
        %v343 = vld [vmem:[%s261 + $0x48] sm:$0xf]
        %v344 = vld [vmem:[%s261 + $0x4c] sm:$0xf]
        %v345 = vld [vmem:[%s261 + $0x50] sm:$0xf]
        %v346 = vld [vmem:[%s261 + $0x54] sm:$0xf]
        %v347 = vld [vmem:[%s261 + $0x58] sm:$0xf]
        %v348 = vld [vmem:[%s261 + $0x5c] sm:$0xf]
        %v349 = vld [vmem:[%s261 + $0x60] sm:$0xf]
        %v350 = vld [vmem:[%s261 + $0x64] sm:$0xf]
        %v351 = vld [vmem:[%s261 + $0x68] sm:$0xf]
        %v352 = vld [vmem:[%s261 + $0x6c] sm:$0xf]
        %v353 = vld [vmem:[%s261 + $0x70] sm:$0xf]
        %v354 = vld [vmem:[%s261 + $0x74] sm:$0xf]
        %v355 = vld [vmem:[%s261 + $0x78] sm:$0xf]
        %v356 = vld [vmem:[%s261 + $0x7c] sm:$0xf]
        %v357 = vld [vmem:[%s270] sm:$0xff]
        %v358 = vld [vmem:[%s270 + $0x8] sm:$0xff]
        %v359 = vld [vmem:[%s270 + $0x10] sm:$0xff]
        %v360 = vld [vmem:[%s270 + $0x18] sm:$0xff]
        %v361 = vld [vmem:[%s270 + $0x20] sm:$0xff]
        %v362 = vld [vmem:[%s270 + $0x28] sm:$0xff]
        %v363 = vld [vmem:[%s270 + $0x30] sm:$0xff]
        %v364 = vld [vmem:[%s270 + $0x38] sm:$0xff]
        %v365 = vld [vmem:[%s270 + $0x40] sm:$0xff]
        %v366 = vld [vmem:[%s270 + $0x48] sm:$0xff]
        %v367 = vld [vmem:[%s270 + $0x50] sm:$0xff]
        %v368 = vld [vmem:[%s270 + $0x58] sm:$0xff]
        %v369 = vld [vmem:[%s270 + $0x60] sm:$0xff]
        %v370 = vld [vmem:[%s270 + $0x68] sm:$0xff]
        %v371 = vld [vmem:[%s270 + $0x70] sm:$0xff]
        %v372 = vld [vmem:[%s270 + $0x78] sm:$0xff]
        %v373 = vld [vmem:[%s270 + $0x80] sm:$0xff]
        %v374 = vld [vmem:[%s270 + $0x88] sm:$0xff]
        %v375 = vld [vmem:[%s270 + $0x90] sm:$0xff]
        %v376 = vld [vmem:[%s270 + $0x98] sm:$0xff]
        %v377 = vld [vmem:[%s270 + $0xa0] sm:$0xff]
        %v378 = vld [vmem:[%s270 + $0xa8] sm:$0xff]
        %v379 = vld [vmem:[%s270 + $0xb0] sm:$0xff]
        %v380 = vld [vmem:[%s270 + $0xb8] sm:$0xff]
        %v381 = vld [vmem:[%s270 + $0xc0] sm:$0xff]
        %v382 = vld [vmem:[%s270 + $0xc8] sm:$0xff]
        %v383 = vld [vmem:[%s270 + $0xd0] sm:$0xff]
        %v384 = vld [vmem:[%s270 + $0xd8] sm:$0xff]
        %v385 = vld [vmem:[%s270 + $0xe0] sm:$0xff]
        %v386 = vld [vmem:[%s270 + $0xe8] sm:$0xff]
        %v387 = vld [vmem:[%s270 + $0xf0] sm:$0xff]
        %v388 = vld [vmem:[%s270 + $0xf8] sm:$0xff]
        %v389 = vld [vmem:[%s279] sm:$0xff]
        %v390 = vld [vmem:[%s279 + $0x8] sm:$0xff]
        %v391 = vld [vmem:[#allocation8] sm:$0xf]
        %v392 = vld [vmem:[#allocation8 + $0x4] sm:$0xf]
        %v393 = vld [vmem:[#allocation8 + $0x8] sm:$0xf]
        %v394 = vld [vmem:[#allocation8 + $0xc] sm:$0xf]
        %v395 = vld [vmem:[#allocation8 + $0x10] sm:$0xf]
        %v396 = vld [vmem:[#allocation8 + $0x14] sm:$0xf]
        %v397 = vld [vmem:[#allocation8 + $0x18] sm:$0xf]
        %v398 = vld [vmem:[#allocation8 + $0x1c] sm:$0xf]
        %v399 = vld [vmem:[#allocation8 + $0x20] sm:$0xf]
        %v400 = vld [vmem:[#allocation8 + $0x24] sm:$0xf]
        %v401 = vld [vmem:[#allocation8 + $0x28] sm:$0xf]
        %v402 = vld [vmem:[#allocation8 + $0x2c] sm:$0xf]
        %v403 = vld [vmem:[#allocation8 + $0x30] sm:$0xf]
        %v404 = vld [vmem:[#allocation8 + $0x34] sm:$0xf]
        %v405 = vld [vmem:[#allocation8 + $0x38] sm:$0xf]
        %v406 = vld [vmem:[#allocation8 + $0x3c] sm:$0xf]
        %v407 = vld [vmem:[#allocation8 + $0x40] sm:$0xf]
        %v408 = vld [vmem:[#allocation8 + $0x44] sm:$0xf]
        %v409 = vld [vmem:[#allocation8 + $0x48] sm:$0xf]
        %v410 = vld [vmem:[#allocation8 + $0x4c] sm:$0xf]
        %v411 = vld [vmem:[#allocation8 + $0x50] sm:$0xf]
        %v412 = vld [vmem:[#allocation8 + $0x54] sm:$0xf]
        %v413 = vld [vmem:[#allocation8 + $0x58] sm:$0xf]
        %v414 = vld [vmem:[#allocation8 + $0x5c] sm:$0xf]
        %v415 = vld [vmem:[#allocation8 + $0x60] sm:$0xf]
        %v416 = vld [vmem:[#allocation8 + $0x64] sm:$0xf]
        %v417 = vld [vmem:[#allocation8 + $0x68] sm:$0xf]
        %v418 = vld [vmem:[#allocation8 + $0x6c] sm:$0xf]
        %v419 = vld [vmem:[#allocation8 + $0x70] sm:$0xf]
        %v420 = vld [vmem:[#allocation8 + $0x74] sm:$0xf]
        %v421 = vld [vmem:[#allocation8 + $0x78] sm:$0xf]
        %v422 = vld [vmem:[#allocation8 + $0x7c] sm:$0xf]
        %v423 = vld [vmem:[#allocation8 + $0x80] sm:$0xf]
        %v424 = vld [vmem:[#allocation8 + $0x84] sm:$0xf]
        %v425 = vld [vmem:[#allocation8 + $0x88] sm:$0xf]
        %v426 = vld [vmem:[#allocation8 + $0x8c] sm:$0xf]
        %v427 = vld [vmem:[#allocation8 + $0x90] sm:$0xf]
        %v428 = vld [vmem:[#allocation8 + $0x94] sm:$0xf]
        %v429 = vld [vmem:[#allocation8 + $0x98] sm:$0xf]
        %v430 = vld [vmem:[#allocation8 + $0x9c] sm:$0xf]
        %v431 = vld [vmem:[#allocation8 + $0xa0] sm:$0xf]
        %v432 = vld [vmem:[#allocation8 + $0xa4] sm:$0xf]
        %v433 = vld [vmem:[#allocation8 + $0xa8] sm:$0xf]
        %v434 = vld [vmem:[#allocation8 + $0xac] sm:$0xf]
        %v435 = vld [vmem:[#allocation8 + $0xb0] sm:$0xf]
        %v436 = vld [vmem:[#allocation8 + $0xb4] sm:$0xf]
        %v437 = vld [vmem:[#allocation8 + $0xb8] sm:$0xf]
        %v438 = vld [vmem:[#allocation8 + $0xbc] sm:$0xf]
        %v439 = vld [vmem:[#allocation8 + $0xc0] sm:$0xf]
        %v440 = vunpack.c.l.bf16 %v439
        %v473 = vunpack.c.l.b16 %v325
        %v474 = vunpack.c.l.b16 %v326
        %v475 = vunpack.c.l.b16 %v327
        %v476 = vunpack.c.l.b16 %v328
        %v477 = vunpack.c.l.b16 %v329
        %v478 = vunpack.c.l.b16 %v330
        %v479 = vunpack.c.l.b16 %v331
        %v480 = vunpack.c.l.b16 %v332
        %v481 = vunpack.c.l.b16 %v333
        %v482 = vunpack.c.l.b16 %v334
        %v483 = vunpack.c.l.b16 %v335
        %v484 = vunpack.c.l.b16 %v336
        %v485 = vunpack.c.l.b16 %v337
        %v486 = vunpack.c.l.b16 %v338
        %v487 = vunpack.c.l.b16 %v339
        %v488 = vunpack.c.l.b16 %v340
        %v489 = vunpack.c.l.b16 %v341
        %v490 = vunpack.c.l.b16 %v342
        %v491 = vunpack.c.l.b16 %v343
        %v492 = vunpack.c.l.b16 %v344
        %v493 = vunpack.c.l.b16 %v345
        %v494 = vunpack.c.l.b16 %v346
        %v495 = vunpack.c.l.b16 %v347
        %v496 = vunpack.c.l.b16 %v348
        %v497 = vunpack.c.l.b16 %v349
        %v498 = vunpack.c.l.b16 %v350
        %v499 = vunpack.c.l.b16 %v351
        %v500 = vunpack.c.l.b16 %v352
        %v501 = vunpack.c.l.b16 %v353
        %v502 = vunpack.c.l.b16 %v354
        %v503 = vunpack.c.l.b16 %v355
        %v504 = vunpack.c.l.b16 %v356
        %v505 = vpack.c.b16 %v474, %v473
        %v506 = vpack.c.b16 %v476, %v475
        %v507 = vpack.c.b16 %v478, %v477
        %v508 = vpack.c.b16 %v480, %v479
        %v509 = vpack.c.b16 %v482, %v481
        %v510 = vpack.c.b16 %v484, %v483
        %v511 = vpack.c.b16 %v486, %v485
        %v512 = vpack.c.b16 %v488, %v487
        %v513 = vpack.c.b16 %v490, %v489
        %v514 = vpack.c.b16 %v492, %v491
        %v515 = vpack.c.b16 %v494, %v493
        %v516 = vpack.c.b16 %v496, %v495
        %v517 = vpack.c.b16 %v498, %v497
        %v518 = vpack.c.b16 %v500, %v499
        %v519 = vpack.c.b16 %v502, %v501
        %v520 = vpack.c.b16 %v504, %v503
        %v553 = vunpack.c.l.b16 %v391
        %v554 = vunpack.c.l.b16 %v392
        %v555 = vunpack.c.l.b16 %v393
        %v556 = vunpack.c.l.b16 %v394
        %v557 = vunpack.c.l.b16 %v395
        %v558 = vunpack.c.l.b16 %v396
        %v559 = vunpack.c.l.b16 %v397
        %v560 = vunpack.c.l.b16 %v398
        %v561 = vunpack.c.l.b16 %v399
        %v562 = vunpack.c.l.b16 %v400
        %v563 = vunpack.c.l.b16 %v401
        %v564 = vunpack.c.l.b16 %v402
        %v565 = vunpack.c.l.b16 %v403
        %v566 = vunpack.c.l.b16 %v404
        %v567 = vunpack.c.l.b16 %v405
        %v568 = vunpack.c.l.b16 %v406
        %v569 = vpack.c.b16 %v554, %v553
        %v570 = vpack.c.b16 %v556, %v555
        %v571 = vpack.c.b16 %v558, %v557
        %v572 = vpack.c.b16 %v560, %v559
        %v573 = vpack.c.b16 %v562, %v561
        %v574 = vpack.c.b16 %v564, %v563
        %v575 = vpack.c.b16 %v566, %v565
        %v576 = vpack.c.b16 %v568, %v567
        %585 = vmatprep.subr.bf16.mxu0 0
        %586 = vmatpush1.bf16.msra.mxu0 %v569
        %587 = vmatprep.subr.bf16.mxu0 0
        %588 = vmatpush1.bf16.msra.mxu0 %v570
        %589 = vmatprep.subr.bf16.mxu0 0
        %590 = vmatpush1.bf16.msra.mxu0 %v571
        %591 = vmatprep.subr.bf16.mxu0 0
        %592 = vmatpush1.bf16.msra.mxu0 %v572
        %593 = vmatprep.subr.bf16.mxu0 0
        %594 = vmatpush1.bf16.msra.mxu0 %v573
        %595 = vmatprep.subr.bf16.mxu0 0
        %596 = vmatpush1.bf16.msra.mxu0 %v574
        %597 = vmatprep.subr.bf16.mxu0 0
        %598 = vmatpush1.bf16.msra.mxu0 %v575
        %599 = vmatprep.subr.bf16.mxu0 0
        %600 = vmatpush1.bf16.msra.mxu0 %v576
        %601 = vmatprep.subr.bf16.mxu0 0
        %602 = vmatpush1.bf16.msra.mxu0 0
        %603 = vmatprep.subr.bf16.mxu0 0
        %604 = vmatpush1.bf16.msra.mxu0 0
        %605 = vmatprep.subr.bf16.mxu0 0
        %606 = vmatpush1.bf16.msra.mxu0 0
        %607 = vmatprep.subr.bf16.mxu0 0
        %608 = vmatpush1.bf16.msra.mxu0 0
        %609 = vmatprep.subr.bf16.mxu0 0
        %610 = vmatpush1.bf16.msra.mxu0 0
        %611 = vmatprep.subr.bf16.mxu0 0
        %612 = vmatpush1.bf16.msra.mxu0 0
        %613 = vmatprep.subr.bf16.mxu0 0
        %614 = vmatpush1.bf16.msra.mxu0 0
        %615 = vmatprep.subr.bf16.mxu0 0
        %616 = vmatpush1.bf16.msra.mxu0 0
        %617 = vmatprep.mubr.bf16.mxu0 0
        %618 = vmatmul.mubr.bf16.gmra.mrb[0].mxu0 %v505
        %v619 = vpop.f32.mrb[0].mxu0
        %v620 = vadd.f32 0.0, %v619
        %v621 = vpop.f32.mrb[0].mxu0
        %v622 = vpop.f32.mrb[0].mxu0
        %v623 = vadd.f32 0.0, %v622
        %v624 = vpop.f32.mrb[0].mxu0
        %625 = vmatprep.mubr.bf16.mxu0 0
        %626 = vmatmul.mubr.bf16.gmra.mrb[0].mxu0 %v506
        %v627 = vpop.f32.mrb[0].mxu0
        %v628 = vadd.f32 0.0, %v627
        %v629 = vpop.f32.mrb[0].mxu0
        %v630 = vpop.f32.mrb[0].mxu0
        %v631 = vadd.f32 0.0, %v630
        %v632 = vpop.f32.mrb[0].mxu0
        %633 = vmatprep.mubr.bf16.mxu0 0
        %634 = vmatmul.mubr.bf16.gmra.mrb[0].mxu0 %v507
        %v635 = vpop.f32.mrb[0].mxu0
        %v636 = vadd.f32 0.0, %v635
        %v637 = vpop.f32.mrb[0].mxu0
        %v638 = vpop.f32.mrb[0].mxu0
        %v639 = vadd.f32 0.0, %v638
        %v640 = vpop.f32.mrb[0].mxu0
        %641 = vmatprep.mubr.bf16.mxu0 0
        %642 = vmatmul.mubr.bf16.gmra.mrb[0].mxu0 %v508
        %v643 = vpop.f32.mrb[0].mxu0
        %v644 = vadd.f32 0.0, %v643
        %v645 = vpop.f32.mrb[0].mxu0
        %v646 = vpop.f32.mrb[0].mxu0
        %v647 = vadd.f32 0.0, %v646
        %v648 = vpop.f32.mrb[0].mxu0
        %649 = vmatprep.mubr.bf16.mxu0 0
        %650 = vmatmul.mubr.bf16.gmra.mrb[0].mxu0 %v509
        %v651 = vpop.f32.mrb[0].mxu0
        %v652 = vadd.f32 0.0, %v651
        %v653 = vpop.f32.mrb[0].mxu0
        %v654 = vpop.f32.mrb[0].mxu0
        %v655 = vadd.f32 0.0, %v654
        %v656 = vpop.f32.mrb[0].mxu0
        %657 = vmatprep.mubr.bf16.mxu0 0
        %658 = vmatmul.mubr.bf16.gmra.mrb[0].mxu0 %v510
        %v659 = vpop.f32.mrb[0].mxu0
        %v660 = vadd.f32 0.0, %v659
        %v661 = vpop.f32.mrb[0].mxu0
        %v662 = vpop.f32.mrb[0].mxu0
        %v663 = vadd.f32 0.0, %v662
        %v664 = vpop.f32.mrb[0].mxu0
        %665 = vmatprep.mubr.bf16.mxu0 0
        %666 = vmatmul.mubr.bf16.gmra.mrb[0].mxu0 %v511
        %v667 = vpop.f32.mrb[0].mxu0
        %v668 = vadd.f32 0.0, %v667
        %v669 = vpop.f32.mrb[0].mxu0
        %v670 = vpop.f32.mrb[0].mxu0
        %v671 = vadd.f32 0.0, %v670
        %v672 = vpop.f32.mrb[0].mxu0
        %673 = vmatprep.mubr.bf16.mxu0 0
        %674 = vmatmul.mubr.bf16.gmra.mrb[0].mxu0 %v512
        %v675 = vpop.f32.mrb[0].mxu0
        %v676 = vadd.f32 0.0, %v675
        %v677 = vpop.f32.mrb[0].mxu0
        %v678 = vpop.f32.mrb[0].mxu0
        %v679 = vadd.f32 0.0, %v678
        %v680 = vpop.f32.mrb[0].mxu0
        %681 = vmatprep.mubr.bf16.mxu0 0
        %682 = vmatmul.mubr.bf16.gmra.mrb[0].mxu0 %v513
        %v683 = vpop.f32.mrb[0].mxu0
        %v684 = vadd.f32 0.0, %v683
        %v685 = vpop.f32.mrb[0].mxu0
        %v686 = vpop.f32.mrb[0].mxu0
        %v687 = vadd.f32 0.0, %v686
        %v688 = vpop.f32.mrb[0].mxu0
        %689 = vmatprep.mubr.bf16.mxu0 0
        %690 = vmatmul.mubr.bf16.gmra.mrb[0].mxu0 %v514
        %v691 = vpop.f32.mrb[0].mxu0
        %v692 = vadd.f32 0.0, %v691
        %v693 = vpop.f32.mrb[0].mxu0
        %v694 = vpop.f32.mrb[0].mxu0
        %v695 = vadd.f32 0.0, %v694
        %v696 = vpop.f32.mrb[0].mxu0
        %697 = vmatprep.mubr.bf16.mxu0 0
        %698 = vmatmul.mubr.bf16.gmra.mrb[0].mxu0 %v515
        %v699 = vpop.f32.mrb[0].mxu0
        %v700 = vadd.f32 0.0, %v699
        %v701 = vpop.f32.mrb[0].mxu0
        %v702 = vpop.f32.mrb[0].mxu0
        %v703 = vadd.f32 0.0, %v702
        %v704 = vpop.f32.mrb[0].mxu0
        %705 = vmatprep.mubr.bf16.mxu0 0
        %706 = vmatmul.mubr.bf16.gmra.mrb[0].mxu0 %v516
        %v707 = vpop.f32.mrb[0].mxu0
        %v708 = vadd.f32 0.0, %v707
        %v709 = vpop.f32.mrb[0].mxu0
        %v710 = vpop.f32.mrb[0].mxu0
        %v711 = vadd.f32 0.0, %v710
        %v712 = vpop.f32.mrb[0].mxu0
        %713 = vmatprep.mubr.bf16.mxu0 0
        %714 = vmatmul.mubr.bf16.gmra.mrb[0].mxu0 %v517
        %v715 = vpop.f32.mrb[0].mxu0
        %v716 = vadd.f32 0.0, %v715
        %v717 = vpop.f32.mrb[0].mxu0
        %v718 = vpop.f32.mrb[0].mxu0
        %v719 = vadd.f32 0.0, %v718
        %v720 = vpop.f32.mrb[0].mxu0
        %721 = vmatprep.mubr.bf16.mxu0 0
        %722 = vmatmul.mubr.bf16.gmra.mrb[0].mxu0 %v518
        %v723 = vpop.f32.mrb[0].mxu0
        %v724 = vadd.f32 0.0, %v723
        %v725 = vpop.f32.mrb[0].mxu0
        %v726 = vpop.f32.mrb[0].mxu0
        %v727 = vadd.f32 0.0, %v726
        %v728 = vpop.f32.mrb[0].mxu0
        %729 = vmatprep.mubr.bf16.mxu0 0
        %730 = vmatmul.mubr.bf16.gmra.mrb[0].mxu0 %v519
        %v731 = vpop.f32.mrb[0].mxu0
        %v732 = vadd.f32 0.0, %v731
        %v733 = vpop.f32.mrb[0].mxu0
        %v734 = vpop.f32.mrb[0].mxu0
        %v735 = vadd.f32 0.0, %v734
        %v736 = vpop.f32.mrb[0].mxu0
        %737 = vmatprep.mubr.bf16.mxu0 0
        %738 = vmatmul.mubr.bf16.gmra.mrb[0].mxu0 %v520
        %v739 = vpop.f32.mrb[0].mxu0
        %v740 = vadd.f32 0.0, %v739
        %v741 = vpop.f32.mrb[0].mxu0
        %v742 = vpop.f32.mrb[0].mxu0
        %v743 = vadd.f32 0.0, %v742
        %v744 = vpop.f32.mrb[0].mxu0
        %745 = vdwg.mxu0
        %v746 = vpack.c.bf16 %v623, %v620
        %v747 = vpack.c.bf16 %v631, %v628
        %v748 = vpack.c.bf16 %v639, %v636
        %v749 = vpack.c.bf16 %v647, %v644
        %v750 = vpack.c.bf16 %v655, %v652
        %v751 = vpack.c.bf16 %v663, %v660
        %v752 = vpack.c.bf16 %v671, %v668
        %v753 = vpack.c.bf16 %v679, %v676
        %v754 = vpack.c.bf16 %v687, %v684
        %v755 = vpack.c.bf16 %v695, %v692
        %v756 = vpack.c.bf16 %v703, %v700
        %v757 = vpack.c.bf16 %v711, %v708
        %v758 = vpack.c.bf16 %v719, %v716
        %v759 = vpack.c.bf16 %v727, %v724
        %v760 = vpack.c.bf16 %v735, %v732
        %v761 = vpack.c.bf16 %v743, %v740
        %v762 = vlaneseq
        %v763 = vshrl.u32 %v762, 7
        %v764 = vsub.s32 0, %v763
        %v765 = vrot.slane %v440, %v764
        %v798 = vunpack.c.l.b16 %v357
        %v799 = vunpack.c.h.b16 %v357
        %v800 = vunpack.c.l.b16 %v358
        %v801 = vunpack.c.h.b16 %v358
        %v802 = vunpack.c.l.b16 %v359
        %v803 = vunpack.c.h.b16 %v359
        %v804 = vunpack.c.l.b16 %v360
        %v805 = vunpack.c.h.b16 %v360
        %v806 = vunpack.c.l.b16 %v361
        %v807 = vunpack.c.h.b16 %v361
        %v808 = vunpack.c.l.b16 %v362
        %v809 = vunpack.c.h.b16 %v362
        %v810 = vunpack.c.l.b16 %v363
        %v811 = vunpack.c.h.b16 %v363
        %v812 = vunpack.c.l.b16 %v364
        %v813 = vunpack.c.h.b16 %v364
        %v814 = vunpack.c.l.b16 %v365
        %v815 = vunpack.c.h.b16 %v365
        %v816 = vunpack.c.l.b16 %v366
        %v817 = vunpack.c.h.b16 %v366
        %v818 = vunpack.c.l.b16 %v367
        %v819 = vunpack.c.h.b16 %v367
        %v820 = vunpack.c.l.b16 %v368
        %v821 = vunpack.c.h.b16 %v368
        %v822 = vunpack.c.l.b16 %v369
        %v823 = vunpack.c.h.b16 %v369
        %v824 = vunpack.c.l.b16 %v370
        %v825 = vunpack.c.h.b16 %v370
        %v826 = vunpack.c.l.b16 %v371
        %v827 = vunpack.c.h.b16 %v371
        %v828 = vunpack.c.l.b16 %v372
        %v829 = vunpack.c.h.b16 %v372
        %v830 = vunpack.c.l.b16 %v373
        %v831 = vunpack.c.h.b16 %v373
        %v832 = vunpack.c.l.b16 %v374
        %v833 = vunpack.c.h.b16 %v374
        %v834 = vunpack.c.l.b16 %v375
        %v835 = vunpack.c.h.b16 %v375
        %v836 = vunpack.c.l.b16 %v376
        %v837 = vunpack.c.h.b16 %v376
        %v838 = vunpack.c.l.b16 %v377
        %v839 = vunpack.c.h.b16 %v377
        %v840 = vunpack.c.l.b16 %v378
        %v841 = vunpack.c.h.b16 %v378
        %v842 = vunpack.c.l.b16 %v379
        %v843 = vunpack.c.h.b16 %v379
        %v844 = vunpack.c.l.b16 %v380
        %v845 = vunpack.c.h.b16 %v380
        %v846 = vunpack.c.l.b16 %v381
        %v847 = vunpack.c.h.b16 %v381
        %v848 = vunpack.c.l.b16 %v382
        %v849 = vunpack.c.h.b16 %v382
        %v850 = vunpack.c.l.b16 %v383
        %v851 = vunpack.c.h.b16 %v383
        %v852 = vunpack.c.l.b16 %v384
        %v853 = vunpack.c.h.b16 %v384
        %v854 = vunpack.c.l.b16 %v385
        %v855 = vunpack.c.h.b16 %v385
        %v856 = vunpack.c.l.b16 %v386
        %v857 = vunpack.c.h.b16 %v386
        %v858 = vunpack.c.l.b16 %v387
        %v859 = vunpack.c.h.b16 %v387
        %v860 = vunpack.c.l.b16 %v388
        %v861 = vunpack.c.h.b16 %v388
        %v862 = vpack.c.b16 %v800, %v798
        %v863 = vpack.c.b16 %v801, %v799
        %v864 = vpack.c.b16 %v804, %v802
        %v865 = vpack.c.b16 %v805, %v803
        %v866 = vpack.c.b16 %v808, %v806
        %v867 = vpack.c.b16 %v809, %v807
        %v868 = vpack.c.b16 %v812, %v810
        %v869 = vpack.c.b16 %v813, %v811
        %v870 = vpack.c.b16 %v816, %v814
        %v871 = vpack.c.b16 %v817, %v815
        %v872 = vpack.c.b16 %v820, %v818
        %v873 = vpack.c.b16 %v821, %v819
        %v874 = vpack.c.b16 %v824, %v822
        %v875 = vpack.c.b16 %v825, %v823
        %v876 = vpack.c.b16 %v828, %v826
        %v877 = vpack.c.b16 %v829, %v827
        %v878 = vpack.c.b16 %v832, %v830
        %v879 = vpack.c.b16 %v833, %v831
        %v880 = vpack.c.b16 %v836, %v834
        %v881 = vpack.c.b16 %v837, %v835
        %v882 = vpack.c.b16 %v840, %v838
        %v883 = vpack.c.b16 %v841, %v839
        %v884 = vpack.c.b16 %v844, %v842
        %v885 = vpack.c.b16 %v845, %v843
        %v886 = vpack.c.b16 %v848, %v846
        %v887 = vpack.c.b16 %v849, %v847
        %v888 = vpack.c.b16 %v852, %v850
        %v889 = vpack.c.b16 %v853, %v851
        %v890 = vpack.c.b16 %v856, %v854
        %v891 = vpack.c.b16 %v857, %v855
        %v892 = vpack.c.b16 %v860, %v858
        %v893 = vpack.c.b16 %v861, %v859
        %926 = vmatprep.subr.bf16.mxu0 0
        %927 = vmatpush1.bf16.msra.mxu0 %v746
        %928 = vmatprep.subr.bf16.mxu0 0
        %929 = vmatpush1.bf16.msra.mxu0 %v747
        %930 = vmatprep.subr.bf16.mxu0 0
        %931 = vmatpush1.bf16.msra.mxu0 %v748
        %932 = vmatprep.subr.bf16.mxu0 0
        %933 = vmatpush1.bf16.msra.mxu0 %v749
        %934 = vmatprep.subr.bf16.mxu0 0
        %935 = vmatpush1.bf16.msra.mxu0 %v750
        %936 = vmatprep.subr.bf16.mxu0 0
        %937 = vmatpush1.bf16.msra.mxu0 %v751
        %938 = vmatprep.subr.bf16.mxu0 0
        %939 = vmatpush1.bf16.msra.mxu0 %v752
        %940 = vmatprep.subr.bf16.mxu0 0
        %941 = vmatpush1.bf16.msra.mxu0 %v753
        %942 = vmatprep.subr.bf16.mxu0 0
        %943 = vmatpush1.bf16.msra.mxu0 %v754
        %944 = vmatprep.subr.bf16.mxu0 0
        %945 = vmatpush1.bf16.msra.mxu0 %v755
        %946 = vmatprep.subr.bf16.mxu0 0
        %947 = vmatpush1.bf16.msra.mxu0 %v756
        %948 = vmatprep.subr.bf16.mxu0 0
        %949 = vmatpush1.bf16.msra.mxu0 %v757
        %950 = vmatprep.subr.bf16.mxu0 0
        %951 = vmatpush1.bf16.msra.mxu0 %v758
        %952 = vmatprep.subr.bf16.mxu0 0
        %953 = vmatpush1.bf16.msra.mxu0 %v759
        %954 = vmatprep.subr.bf16.mxu0 0
        %955 = vmatpush1.bf16.msra.mxu0 %v760
        %956 = vmatprep.subr.bf16.mxu0 0
        %957 = vmatpush1.bf16.msra.mxu0 %v761
        %958 = vmatprep.mubr.bf16.mxu0 %v863
        %959 = vmatmul.mubr.bf16.gmra.mrb[0].mxu0 %v862
        %v960 = vpop.f32.mrb[0].mxu0
        %v961 = vadd.f32 %v765, %v960
        %v962 = vpop.f32.mrb[0].mxu0
        %v963 = vpop.f32.mrb[0].mxu0
        %v964 = vadd.f32 %v765, %v963
        %v965 = vpop.f32.mrb[0].mxu0
        %966 = vmatprep.mubr.bf16.mxu0 %v865
        %967 = vmatmul.mubr.bf16.gmra.mrb[0].mxu0 %v864
        %v968 = vpop.f32.mrb[0].mxu0
        %v969 = vadd.f32 %v765, %v968
        %v970 = vpop.f32.mrb[0].mxu0
        %v971 = vpop.f32.mrb[0].mxu0
        %v972 = vadd.f32 %v765, %v971
        %v973 = vpop.f32.mrb[0].mxu0
        %974 = vmatprep.mubr.bf16.mxu0 %v867
        %975 = vmatmul.mubr.bf16.gmra.mrb[0].mxu0 %v866
        %v976 = vpop.f32.mrb[0].mxu0
        %v977 = vadd.f32 %v765, %v976
        %v978 = vpop.f32.mrb[0].mxu0
        %v979 = vpop.f32.mrb[0].mxu0
        %v980 = vadd.f32 %v765, %v979
        %v981 = vpop.f32.mrb[0].mxu0
        %982 = vmatprep.mubr.bf16.mxu0 %v869
        %983 = vmatmul.mubr.bf16.gmra.mrb[0].mxu0 %v868
        %v984 = vpop.f32.mrb[0].mxu0
        %v985 = vadd.f32 %v765, %v984
        %v986 = vpop.f32.mrb[0].mxu0
        %v987 = vpop.f32.mrb[0].mxu0
        %v988 = vadd.f32 %v765, %v987
        %v989 = vpop.f32.mrb[0].mxu0
        %990 = vmatprep.mubr.bf16.mxu0 %v871
        %991 = vmatmul.mubr.bf16.gmra.mrb[0].mxu0 %v870
        %v992 = vpop.f32.mrb[0].mxu0
        %v993 = vadd.f32 %v765, %v992
        %v994 = vpop.f32.mrb[0].mxu0
        %v995 = vpop.f32.mrb[0].mxu0
        %v996 = vadd.f32 %v765, %v995
        %v997 = vpop.f32.mrb[0].mxu0
        %998 = vmatprep.mubr.bf16.mxu0 %v873
        %999 = vmatmul.mubr.bf16.gmra.mrb[0].mxu0 %v872
        %v1000 = vpop.f32.mrb[0].mxu0
        %v1001 = vadd.f32 %v765, %v1000
        %v1002 = vpop.f32.mrb[0].mxu0
        %v1003 = vpop.f32.mrb[0].mxu0
        %v1004 = vadd.f32 %v765, %v1003
        %v1005 = vpop.f32.mrb[0].mxu0
        %1006 = vmatprep.mubr.bf16.mxu0 %v875
        %1007 = vmatmul.mubr.bf16.gmra.mrb[0].mxu0 %v874
        %v1008 = vpop.f32.mrb[0].mxu0
        %v1009 = vadd.f32 %v765, %v1008
        %v1010 = vpop.f32.mrb[0].mxu0
        %v1011 = vpop.f32.mrb[0].mxu0
        %v1012 = vadd.f32 %v765, %v1011
        %v1013 = vpop.f32.mrb[0].mxu0
        %1014 = vmatprep.mubr.bf16.mxu0 %v877
        %1015 = vmatmul.mubr.bf16.gmra.mrb[0].mxu0 %v876
        %v1016 = vpop.f32.mrb[0].mxu0
        %v1017 = vadd.f32 %v765, %v1016
        %v1018 = vpop.f32.mrb[0].mxu0
        %v1019 = vpop.f32.mrb[0].mxu0
        %v1020 = vadd.f32 %v765, %v1019
        %v1021 = vpop.f32.mrb[0].mxu0
        %1022 = vmatprep.mubr.bf16.mxu0 %v879
        %1023 = vmatmul.mubr.bf16.gmra.mrb[0].mxu0 %v878
        %v1024 = vpop.f32.mrb[0].mxu0
        %v1025 = vadd.f32 %v765, %v1024
        %v1026 = vpop.f32.mrb[0].mxu0
        %v1027 = vpop.f32.mrb[0].mxu0
        %v1028 = vadd.f32 %v765, %v1027
        %v1029 = vpop.f32.mrb[0].mxu0
        %1030 = vmatprep.mubr.bf16.mxu0 %v881
        %1031 = vmatmul.mubr.bf16.gmra.mrb[0].mxu0 %v880
        %v1032 = vpop.f32.mrb[0].mxu0
        %v1033 = vadd.f32 %v765, %v1032
        %v1034 = vpop.f32.mrb[0].mxu0
        %v1035 = vpop.f32.mrb[0].mxu0
        %v1036 = vadd.f32 %v765, %v1035
        %v1037 = vpop.f32.mrb[0].mxu0
        %1038 = vmatprep.mubr.bf16.mxu0 %v883
        %1039 = vmatmul.mubr.bf16.gmra.mrb[0].mxu0 %v882
        %v1040 = vpop.f32.mrb[0].mxu0
        %v1041 = vadd.f32 %v765, %v1040
        %v1042 = vpop.f32.mrb[0].mxu0
        %v1043 = vpop.f32.mrb[0].mxu0
        %v1044 = vadd.f32 %v765, %v1043
        %v1045 = vpop.f32.mrb[0].mxu0
        %1046 = vmatprep.mubr.bf16.mxu0 %v885
        %1047 = vmatmul.mubr.bf16.gmra.mrb[0].mxu0 %v884
        %v1048 = vpop.f32.mrb[0].mxu0
        %v1049 = vadd.f32 %v765, %v1048
        %v1050 = vpop.f32.mrb[0].mxu0
        %v1051 = vpop.f32.mrb[0].mxu0
        %v1052 = vadd.f32 %v765, %v1051
        %v1053 = vpop.f32.mrb[0].mxu0
        %1054 = vmatprep.mubr.bf16.mxu0 %v887
        %1055 = vmatmul.mubr.bf16.gmra.mrb[0].mxu0 %v886
        %v1056 = vpop.f32.mrb[0].mxu0
        %v1057 = vadd.f32 %v765, %v1056
        %v1058 = vpop.f32.mrb[0].mxu0
        %v1059 = vpop.f32.mrb[0].mxu0
        %v1060 = vadd.f32 %v765, %v1059
        %v1061 = vpop.f32.mrb[0].mxu0
        %1062 = vmatprep.mubr.bf16.mxu0 %v889
        %1063 = vmatmul.mubr.bf16.gmra.mrb[0].mxu0 %v888
        %v1064 = vpop.f32.mrb[0].mxu0
        %v1065 = vadd.f32 %v765, %v1064
        %v1066 = vpop.f32.mrb[0].mxu0
        %v1067 = vpop.f32.mrb[0].mxu0
        %v1068 = vadd.f32 %v765, %v1067
        %v1069 = vpop.f32.mrb[0].mxu0
        %1070 = vmatprep.mubr.bf16.mxu0 %v891
        %1071 = vmatmul.mubr.bf16.gmra.mrb[0].mxu0 %v890
        %v1072 = vpop.f32.mrb[0].mxu0
        %v1073 = vadd.f32 %v765, %v1072
        %v1074 = vpop.f32.mrb[0].mxu0
        %v1075 = vpop.f32.mrb[0].mxu0
        %v1076 = vadd.f32 %v765, %v1075
        %v1077 = vpop.f32.mrb[0].mxu0
        %1078 = vmatprep.mubr.bf16.mxu0 %v893
        %1079 = vmatmul.mubr.bf16.gmra.mrb[0].mxu0 %v892
        %v1080 = vpop.f32.mrb[0].mxu0
        %v1081 = vadd.f32 %v765, %v1080
        %v1082 = vpop.f32.mrb[0].mxu0
        %v1083 = vpop.f32.mrb[0].mxu0
        %v1084 = vadd.f32 %v765, %v1083
        %v1085 = vpop.f32.mrb[0].mxu0
        %1086 = vdwg.mxu0
        %v1087 = vmax.f32 %v961, 0.0
        %v1088 = vmax.f32 %v964, 0.0
        %v1089 = vmax.f32 %v969, 0.0
        %v1090 = vmax.f32 %v972, 0.0
        %v1091 = vmax.f32 %v977, 0.0
        %v1092 = vmax.f32 %v980, 0.0
        %v1093 = vmax.f32 %v985, 0.0
        %v1094 = vmax.f32 %v988, 0.0
        %v1095 = vmax.f32 %v993, 0.0
        %v1096 = vmax.f32 %v996, 0.0
        %v1097 = vmax.f32 %v1001, 0.0
        %v1098 = vmax.f32 %v1004, 0.0
        %v1099 = vmax.f32 %v1009, 0.0
        %v1100 = vmax.f32 %v1012, 0.0
        %v1101 = vmax.f32 %v1017, 0.0
        %v1102 = vmax.f32 %v1020, 0.0
        %v1103 = vmax.f32 %v1025, 0.0
        %v1104 = vmax.f32 %v1028, 0.0
        %v1105 = vmax.f32 %v1033, 0.0
        %v1106 = vmax.f32 %v1036, 0.0
        %v1107 = vmax.f32 %v1041, 0.0
        %v1108 = vmax.f32 %v1044, 0.0
        %v1109 = vmax.f32 %v1049, 0.0
        %v1110 = vmax.f32 %v1052, 0.0
        %v1111 = vmax.f32 %v1057, 0.0
        %v1112 = vmax.f32 %v1060, 0.0
        %v1113 = vmax.f32 %v1065, 0.0
        %v1114 = vmax.f32 %v1068, 0.0
        %v1115 = vmax.f32 %v1073, 0.0
        %v1116 = vmax.f32 %v1076, 0.0
        %v1117 = vmax.f32 %v1081, 0.0
        %v1118 = vmax.f32 %v1084, 0.0
        %v1119 = vpack.c.bf16 %v1088, %v1087
        %v1120 = vpack.c.bf16 %v1090, %v1089
        %v1121 = vpack.c.bf16 %v1092, %v1091
        %v1122 = vpack.c.bf16 %v1094, %v1093
        %v1123 = vpack.c.bf16 %v1096, %v1095
        %v1124 = vpack.c.bf16 %v1098, %v1097
        %v1125 = vpack.c.bf16 %v1100, %v1099
        %v1126 = vpack.c.bf16 %v1102, %v1101
        %v1127 = vpack.c.bf16 %v1104, %v1103
        %v1128 = vpack.c.bf16 %v1106, %v1105
        %v1129 = vpack.c.bf16 %v1108, %v1107
        %v1130 = vpack.c.bf16 %v1110, %v1109
        %v1131 = vpack.c.bf16 %v1112, %v1111
        %v1132 = vpack.c.bf16 %v1114, %v1113
        %v1133 = vpack.c.bf16 %v1116, %v1115
        %v1134 = vpack.c.bf16 %v1118, %v1117
        %v1151 = vunpack.c.l.b16 %v407
        %v1152 = vunpack.c.l.b16 %v408
        %v1153 = vunpack.c.l.b16 %v409
        %v1154 = vunpack.c.l.b16 %v410
        %v1155 = vunpack.c.l.b16 %v411
        %v1156 = vunpack.c.l.b16 %v412
        %v1157 = vunpack.c.l.b16 %v413
        %v1158 = vunpack.c.l.b16 %v414
        %v1159 = vunpack.c.l.b16 %v415
        %v1160 = vunpack.c.l.b16 %v416
        %v1161 = vunpack.c.l.b16 %v417
        %v1162 = vunpack.c.l.b16 %v418
        %v1163 = vunpack.c.l.b16 %v419
        %v1164 = vunpack.c.l.b16 %v420
        %v1165 = vunpack.c.l.b16 %v421
        %v1166 = vunpack.c.l.b16 %v422
        %v1167 = vpack.c.b16 %v1152, %v1151
        %v1168 = vpack.c.b16 %v1154, %v1153
        %v1169 = vpack.c.b16 %v1156, %v1155
        %v1170 = vpack.c.b16 %v1158, %v1157
        %v1171 = vpack.c.b16 %v1160, %v1159
        %v1172 = vpack.c.b16 %v1162, %v1161
        %v1173 = vpack.c.b16 %v1164, %v1163
        %v1174 = vpack.c.b16 %v1166, %v1165
        %1183 = vmatprep.subr.bf16.mxu0 0
        %1184 = vmatpush1.bf16.msra.mxu0 %v1167
        %1185 = vmatprep.subr.bf16.mxu0 0
        %1186 = vmatpush1.bf16.msra.mxu0 %v1168
        %1187 = vmatprep.subr.bf16.mxu0 0
        %1188 = vmatpush1.bf16.msra.mxu0 %v1169
        %1189 = vmatprep.subr.bf16.mxu0 0
        %1190 = vmatpush1.bf16.msra.mxu0 %v1170
        %1191 = vmatprep.subr.bf16.mxu0 0
        %1192 = vmatpush1.bf16.msra.mxu0 %v1171
        %1193 = vmatprep.subr.bf16.mxu0 0
        %1194 = vmatpush1.bf16.msra.mxu0 %v1172
        %1195 = vmatprep.subr.bf16.mxu0 0
        %1196 = vmatpush1.bf16.msra.mxu0 %v1173
        %1197 = vmatprep.subr.bf16.mxu0 0
        %1198 = vmatpush1.bf16.msra.mxu0 %v1174
        %1199 = vmatprep.subr.bf16.mxu0 0
        %1200 = vmatpush1.bf16.msra.mxu0 0
        %1201 = vmatprep.subr.bf16.mxu0 0
        %1202 = vmatpush1.bf16.msra.mxu0 0
        %1203 = vmatprep.subr.bf16.mxu0 0
        %1204 = vmatpush1.bf16.msra.mxu0 0
        %1205 = vmatprep.subr.bf16.mxu0 0
        %1206 = vmatpush1.bf16.msra.mxu0 0
        %1207 = vmatprep.subr.bf16.mxu0 0
        %1208 = vmatpush1.bf16.msra.mxu0 0
        %1209 = vmatprep.subr.bf16.mxu0 0
        %1210 = vmatpush1.bf16.msra.mxu0 0
        %1211 = vmatprep.subr.bf16.mxu0 0
        %1212 = vmatpush1.bf16.msra.mxu0 0
        %1213 = vmatprep.subr.bf16.mxu0 0
        %1214 = vmatpush1.bf16.msra.mxu0 0
        %1215 = vmatprep.mubr.bf16.mxu0 0
        %1216 = vmatmul.mubr.bf16.gmra.mrb[0].mxu0 %v1119
        %v1217 = vpop.f32.mrb[0].mxu0
        %v1218 = vadd.f32 0.0, %v1217
        %v1219 = vpop.f32.mrb[0].mxu0
        %v1220 = vpop.f32.mrb[0].mxu0
        %v1221 = vadd.f32 0.0, %v1220
        %v1222 = vpop.f32.mrb[0].mxu0
        %1223 = vmatprep.mubr.bf16.mxu0 0
        %1224 = vmatmul.mubr.bf16.gmra.mrb[0].mxu0 %v1120
        %v1225 = vpop.f32.mrb[0].mxu0
        %v1226 = vadd.f32 0.0, %v1225
        %v1227 = vpop.f32.mrb[0].mxu0
        %v1228 = vpop.f32.mrb[0].mxu0
        %v1229 = vadd.f32 0.0, %v1228
        %v1230 = vpop.f32.mrb[0].mxu0
        %1231 = vmatprep.mubr.bf16.mxu0 0
        %1232 = vmatmul.mubr.bf16.gmra.mrb[0].mxu0 %v1121
        %v1233 = vpop.f32.mrb[0].mxu0
        %v1234 = vadd.f32 0.0, %v1233
        %v1235 = vpop.f32.mrb[0].mxu0
        %v1236 = vpop.f32.mrb[0].mxu0
        %v1237 = vadd.f32 0.0, %v1236
        %v1238 = vpop.f32.mrb[0].mxu0
        %1239 = vmatprep.mubr.bf16.mxu0 0
        %1240 = vmatmul.mubr.bf16.gmra.mrb[0].mxu0 %v1122
        %v1241 = vpop.f32.mrb[0].mxu0
        %v1242 = vadd.f32 0.0, %v1241
        %v1243 = vpop.f32.mrb[0].mxu0
        %v1244 = vpop.f32.mrb[0].mxu0
        %v1245 = vadd.f32 0.0, %v1244
        %v1246 = vpop.f32.mrb[0].mxu0
        %1247 = vmatprep.mubr.bf16.mxu0 0
        %1248 = vmatmul.mubr.bf16.gmra.mrb[0].mxu0 %v1123
        %v1249 = vpop.f32.mrb[0].mxu0
        %v1250 = vadd.f32 0.0, %v1249
        %v1251 = vpop.f32.mrb[0].mxu0
        %v1252 = vpop.f32.mrb[0].mxu0
        %v1253 = vadd.f32 0.0, %v1252
        %v1254 = vpop.f32.mrb[0].mxu0
        %1255 = vmatprep.mubr.bf16.mxu0 0
        %1256 = vmatmul.mubr.bf16.gmra.mrb[0].mxu0 %v1124
        %v1257 = vpop.f32.mrb[0].mxu0
        %v1258 = vadd.f32 0.0, %v1257
        %v1259 = vpop.f32.mrb[0].mxu0
        %v1260 = vpop.f32.mrb[0].mxu0
        %v1261 = vadd.f32 0.0, %v1260
        %v1262 = vpop.f32.mrb[0].mxu0
        %1263 = vmatprep.mubr.bf16.mxu0 0
        %1264 = vmatmul.mubr.bf16.gmra.mrb[0].mxu0 %v1125
        %v1265 = vpop.f32.mrb[0].mxu0
        %v1266 = vadd.f32 0.0, %v1265
        %v1267 = vpop.f32.mrb[0].mxu0
        %v1268 = vpop.f32.mrb[0].mxu0
        %v1269 = vadd.f32 0.0, %v1268
        %v1270 = vpop.f32.mrb[0].mxu0
        %1271 = vmatprep.mubr.bf16.mxu0 0
        %1272 = vmatmul.mubr.bf16.gmra.mrb[0].mxu0 %v1126
        %v1273 = vpop.f32.mrb[0].mxu0
        %v1274 = vadd.f32 0.0, %v1273
        %v1275 = vpop.f32.mrb[0].mxu0
        %v1276 = vpop.f32.mrb[0].mxu0
        %v1277 = vadd.f32 0.0, %v1276
        %v1278 = vpop.f32.mrb[0].mxu0
        %1279 = vmatprep.mubr.bf16.mxu0 0
        %1280 = vmatmul.mubr.bf16.gmra.mrb[0].mxu0 %v1127
        %v1281 = vpop.f32.mrb[0].mxu0
        %v1282 = vadd.f32 0.0, %v1281
        %v1283 = vpop.f32.mrb[0].mxu0
        %v1284 = vpop.f32.mrb[0].mxu0
        %v1285 = vadd.f32 0.0, %v1284
        %v1286 = vpop.f32.mrb[0].mxu0
        %1287 = vmatprep.mubr.bf16.mxu0 0
        %1288 = vmatmul.mubr.bf16.gmra.mrb[0].mxu0 %v1128
        %v1289 = vpop.f32.mrb[0].mxu0
        %v1290 = vadd.f32 0.0, %v1289
        %v1291 = vpop.f32.mrb[0].mxu0
        %v1292 = vpop.f32.mrb[0].mxu0
        %v1293 = vadd.f32 0.0, %v1292
        %v1294 = vpop.f32.mrb[0].mxu0
        %1295 = vmatprep.mubr.bf16.mxu0 0
        %1296 = vmatmul.mubr.bf16.gmra.mrb[0].mxu0 %v1129
        %v1297 = vpop.f32.mrb[0].mxu0
        %v1298 = vadd.f32 0.0, %v1297
        %v1299 = vpop.f32.mrb[0].mxu0
        %v1300 = vpop.f32.mrb[0].mxu0
        %v1301 = vadd.f32 0.0, %v1300
        %v1302 = vpop.f32.mrb[0].mxu0
        %1303 = vmatprep.mubr.bf16.mxu0 0
        %1304 = vmatmul.mubr.bf16.gmra.mrb[0].mxu0 %v1130
        %v1305 = vpop.f32.mrb[0].mxu0
        %v1306 = vadd.f32 0.0, %v1305
        %v1307 = vpop.f32.mrb[0].mxu0
        %v1308 = vpop.f32.mrb[0].mxu0
        %v1309 = vadd.f32 0.0, %v1308
        %v1310 = vpop.f32.mrb[0].mxu0
        %1311 = vmatprep.mubr.bf16.mxu0 0
        %1312 = vmatmul.mubr.bf16.gmra.mrb[0].mxu0 %v1131
        %v1313 = vpop.f32.mrb[0].mxu0
        %v1314 = vadd.f32 0.0, %v1313
        %v1315 = vpop.f32.mrb[0].mxu0
        %v1316 = vpop.f32.mrb[0].mxu0
        %v1317 = vadd.f32 0.0, %v1316
        %v1318 = vpop.f32.mrb[0].mxu0
        %1319 = vmatprep.mubr.bf16.mxu0 0
        %1320 = vmatmul.mubr.bf16.gmra.mrb[0].mxu0 %v1132
        %v1321 = vpop.f32.mrb[0].mxu0
        %v1322 = vadd.f32 0.0, %v1321
        %v1323 = vpop.f32.mrb[0].mxu0
        %v1324 = vpop.f32.mrb[0].mxu0
        %v1325 = vadd.f32 0.0, %v1324
        %v1326 = vpop.f32.mrb[0].mxu0
        %1327 = vmatprep.mubr.bf16.mxu0 0
        %1328 = vmatmul.mubr.bf16.gmra.mrb[0].mxu0 %v1133
        %v1329 = vpop.f32.mrb[0].mxu0
        %v1330 = vadd.f32 0.0, %v1329
        %v1331 = vpop.f32.mrb[0].mxu0
        %v1332 = vpop.f32.mrb[0].mxu0
        %v1333 = vadd.f32 0.0, %v1332
        %v1334 = vpop.f32.mrb[0].mxu0
        %1335 = vmatprep.mubr.bf16.mxu0 0
        %1336 = vmatmul.mubr.bf16.gmra.mrb[0].mxu0 %v1134
        %v1337 = vpop.f32.mrb[0].mxu0
        %v1338 = vadd.f32 0.0, %v1337
        %v1339 = vpop.f32.mrb[0].mxu0
        %v1340 = vpop.f32.mrb[0].mxu0
        %v1341 = vadd.f32 0.0, %v1340
        %v1342 = vpop.f32.mrb[0].mxu0
        %1343 = vdwg.mxu0
        %v1344 = vpack.c.bf16 %v1221, %v1218
        %v1345 = vpack.c.bf16 %v1229, %v1226
        %v1346 = vpack.c.bf16 %v1237, %v1234
        %v1347 = vpack.c.bf16 %v1245, %v1242
        %v1348 = vpack.c.bf16 %v1253, %v1250
        %v1349 = vpack.c.bf16 %v1261, %v1258
        %v1350 = vpack.c.bf16 %v1269, %v1266
        %v1351 = vpack.c.bf16 %v1277, %v1274
        %v1352 = vpack.c.bf16 %v1285, %v1282
        %v1353 = vpack.c.bf16 %v1293, %v1290
        %v1354 = vpack.c.bf16 %v1301, %v1298
        %v1355 = vpack.c.bf16 %v1309, %v1306
        %v1356 = vpack.c.bf16 %v1317, %v1314
        %v1357 = vpack.c.bf16 %v1325, %v1322
        %v1358 = vpack.c.bf16 %v1333, %v1330
        %v1359 = vpack.c.bf16 %v1341, %v1338
        %v1360 = vlaneseq
        %v1361 = vshrl.u32 %v1360, 7
        %v1362 = vsub.s32 1, %v1361
        %v1363 = vrot.slane %v440, %v1362
        %1364 = vmatprep.subr.bf16.mxu0 0
        %1365 = vmatpush1.bf16.msra.mxu0 %v1344
        %1366 = vmatprep.subr.bf16.mxu0 0
        %1367 = vmatpush1.bf16.msra.mxu0 %v1345
        %1368 = vmatprep.subr.bf16.mxu0 0
        %1369 = vmatpush1.bf16.msra.mxu0 %v1346
        %1370 = vmatprep.subr.bf16.mxu0 0
        %1371 = vmatpush1.bf16.msra.mxu0 %v1347
        %1372 = vmatprep.subr.bf16.mxu0 0
        %1373 = vmatpush1.bf16.msra.mxu0 %v1348
        %1374 = vmatprep.subr.bf16.mxu0 0
        %1375 = vmatpush1.bf16.msra.mxu0 %v1349
        %1376 = vmatprep.subr.bf16.mxu0 0
        %1377 = vmatpush1.bf16.msra.mxu0 %v1350
        %1378 = vmatprep.subr.bf16.mxu0 0
        %1379 = vmatpush1.bf16.msra.mxu0 %v1351
        %1380 = vmatprep.subr.bf16.mxu0 0
        %1381 = vmatpush1.bf16.msra.mxu0 %v1352
        %1382 = vmatprep.subr.bf16.mxu0 0
        %1383 = vmatpush1.bf16.msra.mxu0 %v1353
        %1384 = vmatprep.subr.bf16.mxu0 0
        %1385 = vmatpush1.bf16.msra.mxu0 %v1354
        %1386 = vmatprep.subr.bf16.mxu0 0
        %1387 = vmatpush1.bf16.msra.mxu0 %v1355
        %1388 = vmatprep.subr.bf16.mxu0 0
        %1389 = vmatpush1.bf16.msra.mxu0 %v1356
        %1390 = vmatprep.subr.bf16.mxu0 0
        %1391 = vmatpush1.bf16.msra.mxu0 %v1357
        %1392 = vmatprep.subr.bf16.mxu0 0
        %1393 = vmatpush1.bf16.msra.mxu0 %v1358
        %1394 = vmatprep.subr.bf16.mxu0 0
        %1395 = vmatpush1.bf16.msra.mxu0 %v1359
        %1396 = vmatprep.mubr.bf16.mxu0 %v863
        %1397 = vmatmul.mubr.bf16.gmra.mrb[0].mxu0 %v862
        %v1398 = vpop.f32.mrb[0].mxu0
        %v1399 = vadd.f32 %v1363, %v1398
        %v1400 = vpop.f32.mrb[0].mxu0
        %v1401 = vpop.f32.mrb[0].mxu0
        %v1402 = vadd.f32 %v1363, %v1401
        %v1403 = vpop.f32.mrb[0].mxu0
        %1404 = vmatprep.mubr.bf16.mxu0 %v865
        %1405 = vmatmul.mubr.bf16.gmra.mrb[0].mxu0 %v864
        %v1406 = vpop.f32.mrb[0].mxu0
        %v1407 = vadd.f32 %v1363, %v1406
        %v1408 = vpop.f32.mrb[0].mxu0
        %v1409 = vpop.f32.mrb[0].mxu0
        %v1410 = vadd.f32 %v1363, %v1409
        %v1411 = vpop.f32.mrb[0].mxu0
        %1412 = vmatprep.mubr.bf16.mxu0 %v867
        %1413 = vmatmul.mubr.bf16.gmra.mrb[0].mxu0 %v866
        %v1414 = vpop.f32.mrb[0].mxu0
        %v1415 = vadd.f32 %v1363, %v1414
        %v1416 = vpop.f32.mrb[0].mxu0
        %v1417 = vpop.f32.mrb[0].mxu0
        %v1418 = vadd.f32 %v1363, %v1417
        %v1419 = vpop.f32.mrb[0].mxu0
        %1420 = vmatprep.mubr.bf16.mxu0 %v869
        %1421 = vmatmul.mubr.bf16.gmra.mrb[0].mxu0 %v868
        %v1422 = vpop.f32.mrb[0].mxu0
        %v1423 = vadd.f32 %v1363, %v1422
        %v1424 = vpop.f32.mrb[0].mxu0
        %v1425 = vpop.f32.mrb[0].mxu0
        %v1426 = vadd.f32 %v1363, %v1425
        %v1427 = vpop.f32.mrb[0].mxu0
        %1428 = vmatprep.mubr.bf16.mxu0 %v871
        %1429 = vmatmul.mubr.bf16.gmra.mrb[0].mxu0 %v870
        %v1430 = vpop.f32.mrb[0].mxu0
        %v1431 = vadd.f32 %v1363, %v1430
        %v1432 = vpop.f32.mrb[0].mxu0
        %v1433 = vpop.f32.mrb[0].mxu0
        %v1434 = vadd.f32 %v1363, %v1433
        %v1435 = vpop.f32.mrb[0].mxu0
        %1436 = vmatprep.mubr.bf16.mxu0 %v873
        %1437 = vmatmul.mubr.bf16.gmra.mrb[0].mxu0 %v872
        %v1438 = vpop.f32.mrb[0].mxu0
        %v1439 = vadd.f32 %v1363, %v1438
        %v1440 = vpop.f32.mrb[0].mxu0
        %v1441 = vpop.f32.mrb[0].mxu0
        %v1442 = vadd.f32 %v1363, %v1441
        %v1443 = vpop.f32.mrb[0].mxu0
        %1444 = vmatprep.mubr.bf16.mxu0 %v875
        %1445 = vmatmul.mubr.bf16.gmra.mrb[0].mxu0 %v874
        %v1446 = vpop.f32.mrb[0].mxu0
        %v1447 = vadd.f32 %v1363, %v1446
        %v1448 = vpop.f32.mrb[0].mxu0
        %v1449 = vpop.f32.mrb[0].mxu0
        %v1450 = vadd.f32 %v1363, %v1449
        %v1451 = vpop.f32.mrb[0].mxu0
        %1452 = vmatprep.mubr.bf16.mxu0 %v877
        %1453 = vmatmul.mubr.bf16.gmra.mrb[0].mxu0 %v876
        %v1454 = vpop.f32.mrb[0].mxu0
        %v1455 = vadd.f32 %v1363, %v1454
        %v1456 = vpop.f32.mrb[0].mxu0
        %v1457 = vpop.f32.mrb[0].mxu0
        %v1458 = vadd.f32 %v1363, %v1457
        %v1459 = vpop.f32.mrb[0].mxu0
        %1460 = vmatprep.mubr.bf16.mxu0 %v879
        %1461 = vmatmul.mubr.bf16.gmra.mrb[0].mxu0 %v878
        %v1462 = vpop.f32.mrb[0].mxu0
        %v1463 = vadd.f32 %v1363, %v1462
        %v1464 = vpop.f32.mrb[0].mxu0
        %v1465 = vpop.f32.mrb[0].mxu0
        %v1466 = vadd.f32 %v1363, %v1465
        %v1467 = vpop.f32.mrb[0].mxu0
        %1468 = vmatprep.mubr.bf16.mxu0 %v881
        %1469 = vmatmul.mubr.bf16.gmra.mrb[0].mxu0 %v880
        %v1470 = vpop.f32.mrb[0].mxu0
        %v1471 = vadd.f32 %v1363, %v1470
        %v1472 = vpop.f32.mrb[0].mxu0
        %v1473 = vpop.f32.mrb[0].mxu0
        %v1474 = vadd.f32 %v1363, %v1473
        %v1475 = vpop.f32.mrb[0].mxu0
        %1476 = vmatprep.mubr.bf16.mxu0 %v883
        %1477 = vmatmul.mubr.bf16.gmra.mrb[0].mxu0 %v882
        %v1478 = vpop.f32.mrb[0].mxu0
        %v1479 = vadd.f32 %v1363, %v1478
        %v1480 = vpop.f32.mrb[0].mxu0
        %v1481 = vpop.f32.mrb[0].mxu0
        %v1482 = vadd.f32 %v1363, %v1481
        %v1483 = vpop.f32.mrb[0].mxu0
        %1484 = vmatprep.mubr.bf16.mxu0 %v885
        %1485 = vmatmul.mubr.bf16.gmra.mrb[0].mxu0 %v884
        %v1486 = vpop.f32.mrb[0].mxu0
        %v1487 = vadd.f32 %v1363, %v1486
        %v1488 = vpop.f32.mrb[0].mxu0
        %v1489 = vpop.f32.mrb[0].mxu0
        %v1490 = vadd.f32 %v1363, %v1489
        %v1491 = vpop.f32.mrb[0].mxu0
        %1492 = vmatprep.mubr.bf16.mxu0 %v887
        %1493 = vmatmul.mubr.bf16.gmra.mrb[0].mxu0 %v886
        %v1494 = vpop.f32.mrb[0].mxu0
        %v1495 = vadd.f32 %v1363, %v1494
        %v1496 = vpop.f32.mrb[0].mxu0
        %v1497 = vpop.f32.mrb[0].mxu0
        %v1498 = vadd.f32 %v1363, %v1497
        %v1499 = vpop.f32.mrb[0].mxu0
        %1500 = vmatprep.mubr.bf16.mxu0 %v889
        %1501 = vmatmul.mubr.bf16.gmra.mrb[0].mxu0 %v888
        %v1502 = vpop.f32.mrb[0].mxu0
        %v1503 = vadd.f32 %v1363, %v1502
        %v1504 = vpop.f32.mrb[0].mxu0
        %v1505 = vpop.f32.mrb[0].mxu0
        %v1506 = vadd.f32 %v1363, %v1505
        %v1507 = vpop.f32.mrb[0].mxu0
        %1508 = vmatprep.mubr.bf16.mxu0 %v891
        %1509 = vmatmul.mubr.bf16.gmra.mrb[0].mxu0 %v890
        %v1510 = vpop.f32.mrb[0].mxu0
        %v1511 = vadd.f32 %v1363, %v1510
        %v1512 = vpop.f32.mrb[0].mxu0
        %v1513 = vpop.f32.mrb[0].mxu0
        %v1514 = vadd.f32 %v1363, %v1513
        %v1515 = vpop.f32.mrb[0].mxu0
        %1516 = vmatprep.mubr.bf16.mxu0 %v893
        %1517 = vmatmul.mubr.bf16.gmra.mrb[0].mxu0 %v892
        %v1518 = vpop.f32.mrb[0].mxu0
        %v1519 = vadd.f32 %v1363, %v1518
        %v1520 = vpop.f32.mrb[0].mxu0
        %v1521 = vpop.f32.mrb[0].mxu0
        %v1522 = vadd.f32 %v1363, %v1521
        %v1523 = vpop.f32.mrb[0].mxu0
        %1524 = vdwg.mxu0
        %v1525 = vmax.f32 %v1399, 0.0
        %v1526 = vmax.f32 %v1402, 0.0
        %v1527 = vmax.f32 %v1407, 0.0
        %v1528 = vmax.f32 %v1410, 0.0
        %v1529 = vmax.f32 %v1415, 0.0
        %v1530 = vmax.f32 %v1418, 0.0
        %v1531 = vmax.f32 %v1423, 0.0
        %v1532 = vmax.f32 %v1426, 0.0
        %v1533 = vmax.f32 %v1431, 0.0
        %v1534 = vmax.f32 %v1434, 0.0
        %v1535 = vmax.f32 %v1439, 0.0
        %v1536 = vmax.f32 %v1442, 0.0
        %v1537 = vmax.f32 %v1447, 0.0
        %v1538 = vmax.f32 %v1450, 0.0
        %v1539 = vmax.f32 %v1455, 0.0
        %v1540 = vmax.f32 %v1458, 0.0
        %v1541 = vmax.f32 %v1463, 0.0
        %v1542 = vmax.f32 %v1466, 0.0
        %v1543 = vmax.f32 %v1471, 0.0
        %v1544 = vmax.f32 %v1474, 0.0
        %v1545 = vmax.f32 %v1479, 0.0
        %v1546 = vmax.f32 %v1482, 0.0
        %v1547 = vmax.f32 %v1487, 0.0
        %v1548 = vmax.f32 %v1490, 0.0
        %v1549 = vmax.f32 %v1495, 0.0
        %v1550 = vmax.f32 %v1498, 0.0
        %v1551 = vmax.f32 %v1503, 0.0
        %v1552 = vmax.f32 %v1506, 0.0
        %v1553 = vmax.f32 %v1511, 0.0
        %v1554 = vmax.f32 %v1514, 0.0
        %v1555 = vmax.f32 %v1519, 0.0
        %v1556 = vmax.f32 %v1522, 0.0
        %v1557 = vpack.c.bf16 %v1526, %v1525
        %v1558 = vpack.c.bf16 %v1528, %v1527
        %v1559 = vpack.c.bf16 %v1530, %v1529
        %v1560 = vpack.c.bf16 %v1532, %v1531
        %v1561 = vpack.c.bf16 %v1534, %v1533
        %v1562 = vpack.c.bf16 %v1536, %v1535
        %v1563 = vpack.c.bf16 %v1538, %v1537
        %v1564 = vpack.c.bf16 %v1540, %v1539
        %v1565 = vpack.c.bf16 %v1542, %v1541
        %v1566 = vpack.c.bf16 %v1544, %v1543
        %v1567 = vpack.c.bf16 %v1546, %v1545
        %v1568 = vpack.c.bf16 %v1548, %v1547
        %v1569 = vpack.c.bf16 %v1550, %v1549
        %v1570 = vpack.c.bf16 %v1552, %v1551
        %v1571 = vpack.c.bf16 %v1554, %v1553
        %v1572 = vpack.c.bf16 %v1556, %v1555
        %v1575 = vunpack.c.l.b16 %v389
        %v1576 = vunpack.c.h.b16 %v389
        %v1577 = vunpack.c.l.b16 %v390
        %v1578 = vunpack.c.h.b16 %v390
        %v1579 = vpack.c.b16 %v1577, %v1575
        %v1580 = vpack.c.b16 %v1578, %v1576
        %1583 = vmatprep.subr.bf16.mxu0 0
        %1584 = vmatpush1.bf16.msra.mxu0 %v1557
        %1585 = vmatprep.subr.bf16.mxu0 0
        %1586 = vmatpush1.bf16.msra.mxu0 %v1558
        %1587 = vmatprep.subr.bf16.mxu0 0
        %1588 = vmatpush1.bf16.msra.mxu0 %v1559
        %1589 = vmatprep.subr.bf16.mxu0 0
        %1590 = vmatpush1.bf16.msra.mxu0 %v1560
        %1591 = vmatprep.subr.bf16.mxu0 0
        %1592 = vmatpush1.bf16.msra.mxu0 %v1561
        %1593 = vmatprep.subr.bf16.mxu0 0
        %1594 = vmatpush1.bf16.msra.mxu0 %v1562
        %1595 = vmatprep.subr.bf16.mxu0 0
        %1596 = vmatpush1.bf16.msra.mxu0 %v1563
        %1597 = vmatprep.subr.bf16.mxu0 0
        %1598 = vmatpush1.bf16.msra.mxu0 %v1564
        %1599 = vmatprep.subr.bf16.mxu0 0
        %1600 = vmatpush1.bf16.msra.mxu0 %v1565
        %1601 = vmatprep.subr.bf16.mxu0 0
        %1602 = vmatpush1.bf16.msra.mxu0 %v1566
        %1603 = vmatprep.subr.bf16.mxu0 0
        %1604 = vmatpush1.bf16.msra.mxu0 %v1567
        %1605 = vmatprep.subr.bf16.mxu0 0
        %1606 = vmatpush1.bf16.msra.mxu0 %v1568
        %1607 = vmatprep.subr.bf16.mxu0 0
        %1608 = vmatpush1.bf16.msra.mxu0 %v1569
        %1609 = vmatprep.subr.bf16.mxu0 0
        %1610 = vmatpush1.bf16.msra.mxu0 %v1570
        %1611 = vmatprep.subr.bf16.mxu0 0
        %1612 = vmatpush1.bf16.msra.mxu0 %v1571
        %1613 = vmatprep.subr.bf16.mxu0 0
        %1614 = vmatpush1.bf16.msra.mxu0 %v1572
        %1615 = vmatprep.mubr.bf16.mxu0 %v1580
        %1616 = vmatmul.mubr.bf16.gmra.mrb[0].mxu0 %v1579
        %v1617 = vpop.f32.mrb[0].mxu0
        %v1618 = vadd.f32 0.0, %v1617
        %v1619 = vpop.f32.mrb[0].mxu0
        %v1620 = vpop.f32.mrb[0].mxu0
        %v1621 = vadd.f32 0.0, %v1620
        %v1622 = vpop.f32.mrb[0].mxu0
        %1623 = vdwg.mxu0
        %v1624 = vpack.c.bf16 %v1621, %v1618
        %v1625 = vlaneseq
        %v1626 = vshrl.u32 %v1625, 7
        %v1627 = vsub.s32 2, %v1626
        %v1628 = vrot.slane %v440, %v1627
        %v1645 = vunpack.c.l.b16 %v423
        %v1646 = vunpack.c.l.b16 %v424
        %v1647 = vunpack.c.l.b16 %v425
        %v1648 = vunpack.c.l.b16 %v426
        %v1649 = vunpack.c.l.b16 %v427
        %v1650 = vunpack.c.l.b16 %v428
        %v1651 = vunpack.c.l.b16 %v429
        %v1652 = vunpack.c.l.b16 %v430
        %v1653 = vunpack.c.l.b16 %v431
        %v1654 = vunpack.c.l.b16 %v432
        %v1655 = vunpack.c.l.b16 %v433
        %v1656 = vunpack.c.l.b16 %v434
        %v1657 = vunpack.c.l.b16 %v435
        %v1658 = vunpack.c.l.b16 %v436
        %v1659 = vunpack.c.l.b16 %v437
        %v1660 = vunpack.c.l.b16 %v438
        %v1661 = vpack.c.b16 %v1646, %v1645
        %v1662 = vpack.c.b16 %v1648, %v1647
        %v1663 = vpack.c.b16 %v1650, %v1649
        %v1664 = vpack.c.b16 %v1652, %v1651
        %v1665 = vpack.c.b16 %v1654, %v1653
        %v1666 = vpack.c.b16 %v1656, %v1655
        %v1667 = vpack.c.b16 %v1658, %v1657
        %v1668 = vpack.c.b16 %v1660, %v1659
        %1677 = vmatprep.subr.bf16.mxu0 0
        %1678 = vmatpush1.bf16.msra.mxu0 %v1661
        %1679 = vmatprep.subr.bf16.mxu0 0
        %1680 = vmatpush1.bf16.msra.mxu0 %v1662
        %1681 = vmatprep.subr.bf16.mxu0 0
        %1682 = vmatpush1.bf16.msra.mxu0 %v1663
        %1683 = vmatprep.subr.bf16.mxu0 0
        %1684 = vmatpush1.bf16.msra.mxu0 %v1664
        %1685 = vmatprep.subr.bf16.mxu0 0
        %1686 = vmatpush1.bf16.msra.mxu0 %v1665
        %1687 = vmatprep.subr.bf16.mxu0 0
        %1688 = vmatpush1.bf16.msra.mxu0 %v1666
        %1689 = vmatprep.subr.bf16.mxu0 0
        %1690 = vmatpush1.bf16.msra.mxu0 %v1667
        %1691 = vmatprep.subr.bf16.mxu0 0
        %1692 = vmatpush1.bf16.msra.mxu0 %v1668
        %1693 = vmatprep.subr.bf16.mxu0 0
        %1694 = vmatpush1.bf16.msra.mxu0 0
        %1695 = vmatprep.subr.bf16.mxu0 0
        %1696 = vmatpush1.bf16.msra.mxu0 0
        %1697 = vmatprep.subr.bf16.mxu0 0
        %1698 = vmatpush1.bf16.msra.mxu0 0
        %1699 = vmatprep.subr.bf16.mxu0 0
        %1700 = vmatpush1.bf16.msra.mxu0 0
        %1701 = vmatprep.subr.bf16.mxu0 0
        %1702 = vmatpush1.bf16.msra.mxu0 0
        %1703 = vmatprep.subr.bf16.mxu0 0
        %1704 = vmatpush1.bf16.msra.mxu0 0
        %1705 = vmatprep.subr.bf16.mxu0 0
        %1706 = vmatpush1.bf16.msra.mxu0 0
        %1707 = vmatprep.subr.bf16.mxu0 0
        %1708 = vmatpush1.bf16.msra.mxu0 0
        %1709 = vmatprep.mubr.bf16.mxu0 0
        %1710 = vmatmul.mubr.bf16.gmra.mrb[0].mxu0 %v1624
        %v1711 = vpop.f32.mrb[0].mxu0
        %v1712 = vadd.f32 %v1628, %v1711
        %v1713 = vpop.f32.mrb[0].mxu0
        %v1714 = vpop.f32.mrb[0].mxu0
        %v1715 = vadd.f32 %v1628, %v1714
        %v1716 = vpop.f32.mrb[0].mxu0
        %1717 = vdwg.mxu0
        %1718 = vst [vmem:[%s317] sm:$0xff] %v1712
        %1719 = vst [vmem:[%s317 + $0x8] sm:$0xff] %v1715
        %s1720 = sand.u32 %s136, 1
        %s1721 = scalar_lea.sflag [#allocation4], %s1720
        %s1722 = sand.u32 %s136, 1
        %s1723 = smul.addr %s1722, 16
        %s1724 = scalar_lea.vmem [#allocation10], %s1723
        // Predicated region
        $region53: #{tpu_custom_call.1} parent=35 // pred_check
          %p1725 = pneg %p146
        $region54: #{tpu_custom_call.1} parent=35 // pred_check_branch
          %1727 = sbr.rel (%p1725) target = $region56
        $region55: #{tpu_custom_call.1} parent=35 // pred_region
          %s1728 = smul.u32 2, %s25
          %s1730 = ssub.s32 256, 256
          %1731 = vsyncadd %s1721, %s1730
          %s1732 = smul.addr %s1728, 128
          %s1733 = scalar_lea.hbm %s4, %s1732
          %s1734 = sshll.u32 %s1724, 4
          %s1735 = int_to_ptr.vmem [resolvable:$true] %s1734
          %1740 = dma.vmem_to_hbm [thread:$0]  %s1735, 256, %s1733, %s1721, 128, 128, 8
        $region56: #{tpu_custom_call.1} parent=35 // pred_fallthru
          _
      $region36: #{tpu_custom_call.1} parent=5 // pred_fallthru
        _
      %p1741 = scmp.le.s32.totalorder 2, %s20
      // Predicated region
      $region57: #{tpu_custom_call.1} parent=5 // pred_check
        %p1742 = pneg %p1741
      $region58: #{tpu_custom_call.1} parent=5 // pred_check_branch
        %1744 = sbr.rel (%p1742) target = $region60
      $region59: #{tpu_custom_call.1} parent=5 // pred_region
        %s1745 = ssub.s32 %s20, 2
        // Predicated region
        $region61: #{tpu_custom_call.1} parent=59 // pred_check
          %p1746 = pneg %p152
        $region62: #{tpu_custom_call.1} parent=59 // pred_check_branch
          %1748 = sbr.rel (%p1746) target = $region64
        $region63: #{tpu_custom_call.1} parent=59 // pred_region
          %s1749 = sand.u32 %s137, 1
          %s1750 = scalar_lea.sflag [#allocation4], %s1749
          %s1751 = sand.u32 %s137, 1
          %s1752 = smul.addr %s1751, 16
          %s1753 = scalar_lea.vmem [#allocation10], %s1752
          %1754 = dma.done %s1750, 256
        $region64: #{tpu_custom_call.1} parent=59 // pred_fallthru
          _
      $region60: #{tpu_custom_call.1} parent=5 // pred_fallthru
        _
    $region6: #{tpu_custom_call.1} parent=1 // loop_footer
      %s24 = sadd.s32 1, %s20
    $region7: #{tpu_custom_call.1} parent=1 // loop_footer_branch
      %19 = sbr.rel target = $region3
    $region8: #{tpu_custom_call.1} parent=1 // loop_exit
      _
    %1755 = vsyncpa [#allocation3], 1
    %s1756 = scalar_lea.sflag [#allocation3], 1
    %1757 = vsyncpa %s1756, 1
    %1758 = vsyncpa [#allocation6], 1
    %s1759 = scalar_lea.sflag [#allocation6], 1
    %1760 = vsyncpa %s1759, 1
    %1761 = vsyncpa [#allocation9], 1
    %1762 = vsyncpa [#allocation4], 1
    %s1763 = scalar_lea.sflag [#allocation4], 1
    %1764 = vsyncpa %s1763, 1

</llo_original>
